<compile_context>
chip_gen: v5e
topology: v5e:2x2
jax: 0.10.0
libtpu: 0.0.40
codegen_flags: <defaults>
</compile_context>

<pallas_src>
import functools
import math

import jax
import jax.numpy as jnp
from jax.experimental import pallas as pl
from jax.experimental.pallas import tpu as pltpu


_GELU_C = math.sqrt(2.0 / math.pi)


def gelu_tanh(x):
    # TODO(synk): HF "gelu" default is the exact erf form; tanh approximation
    # used here for a TPU-friendly (EUP tanh) lowering. The reference below
    # uses the same form.
    return 0.5 * x * (1.0 + jnp.tanh(_GELU_C * (x + 0.044715 * x * x * x)))


# ---------------------------------------------------------------------------
# Fused kernel: one grid step = (batch tile bt, layer l).
# The hidden state for the batch tile lives in the VMEM-resident output block
# across the (inner, sequential) layer axis.
# ---------------------------------------------------------------------------
def transformer_stack_kernel(x_ref, bias_ref,
                             wq_ref, bq_ref, wk_ref, bk_ref, wv_ref, bv_ref,
                             wo_ref, bo_ref, ln1g_ref, ln1b_ref,
                             w1_ref, b1_ref, w2_ref, b2_ref,
                             ln2g_ref, ln2b_ref,
                             out_ref, ctx_ref, *, n_heads):
    l = pl.program_id(1)

    @pl.when(l == 0)
    def _():
        out_ref[...] = x_ref[...]          # load embeddings once per batch tile

    TB, S, D = out_ref.shape
    dh = D // n_heads
    scale = 1.0 / math.sqrt(dh)

    x = out_ref[...].reshape(TB * S, D)        # (TB*S, D) f32 current hidden state
    x_bf = x.astype(jnp.bfloat16)              # MXU operand (f32 accumulation kept)

    def proj(w_ref, b_ref):
        return jnp.dot(x_bf, w_ref[0], preferred_element_type=jnp.float32) + b_ref[0]

    # --- multi-head self-attention ------------------------------------------------
    q = proj(wq_ref, bq_ref) * scale           # (TB*S, D) f32
    k = proj(wk_ref, bk_ref)
    v = proj(wv_ref, bv_ref)

    for tb in range(TB):                       # TB is tiny (B // 2)
        r0 = tb * S
        bias = bias_ref[tb]                    # (1, S) additive mask bias, hoisted
        # TODO(synk): for production n_heads, convert to lax.fori_loop over
        # VMEM-resident q/k/v refs and pack >=2 heads per score matmul so the
        # MXU contraction depth (128/256) is filled instead of dh.
        for h in range(n_heads):               # small, static unroll
            c0 = h * dh
            qh = q[r0:r0 + S, c0:c0 + dh].astype(jnp.bfloat16)
            kh = k[r0:r0 + S, c0:c0 + dh].astype(jnp.bfloat16)
            vh = v[r0:r0 + S, c0:c0 + dh].astype(jnp.bfloat16)
            s = jax.lax.dot_general(qh, kh, (((1,), (1,)), ((), ())),
                                    preferred_element_type=jnp.float32)   # (S, S)
            s = s + bias                                                  # masked_fill
            s = s - jnp.max(s, axis=-1, keepdims=True)
            p = jnp.exp(s)
            p = p * pl.reciprocal(jnp.sum(p, axis=-1, keepdims=True), approx=True)
            # TODO(synk): attention dropout / head_mask omitted (eval mode, None).
            ctx_h = jnp.dot(p.astype(jnp.bfloat16), vh,
                            preferred_element_type=jnp.float32)           # (S, dh)
            # park this head's ctx at its static lane offset; O-projection is
            # done once after the head loop with a full-depth matmul.
            ctx_ref[pl.ds(r0, S), pl.ds(c0, dh)] = ctx_h

    sa = (jnp.dot(ctx_ref[...].astype(jnp.bfloat16), wo_ref[0],
                  preferred_element_type=jnp.float32) + bo_ref[0])        # (TB*S, D)

    def layer_norm(val, g_ref, b_ref):
        mu = jnp.mean(val, axis=-1, keepdims=True)
        var = jnp.mean((val - mu) ** 2, axis=-1, keepdims=True)
        return (val - mu) * jax.lax.rsqrt(var + 1e-12) * g_ref[0] + b_ref[0]

    sa = layer_norm(sa + x, ln1g_ref, ln1b_ref)          # residual + sa_layer_norm

    # --- FFN ----------------------------------------------------------------------
    h1 = (jnp.dot(sa.astype(jnp.bfloat16), w1_ref[0],
                  preferred_element_type=jnp.float32) + b1_ref[0])
    h1 = gelu_tanh(h1)                                   # f32 VPU/EUP math
    ff = (jnp.dot(h1.astype(jnp.bfloat16), w2_ref[0],
                  preferred_element_type=jnp.float32) + b2_ref[0])
    # TODO(synk): FFN dropout omitted (eval mode => identity).
    y = layer_norm(ff + sa, ln2g_ref, ln2b_ref)          # residual + output_layer_norm

    out_ref[...] = y.reshape(TB, S, D)                   # carry to next layer; final
                                                         # block is written back once


# ---------------------------------------------------------------------------
# Param preparation (called ONCE, outside the forward): matmul weights -> bf16
# MXU operands, biases / LayerNorm params stay f32.
# ---------------------------------------------------------------------------
def prepare_params(params):
    bf16_names = {"wq", "wk", "wv", "wo", "w1", "w2"}
    return {k: (v.astype(jnp.bfloat16) if k in bf16_names else v.astype(jnp.float32))
            for k, v in params.items()}


# ---------------------------------------------------------------------------
# Wrapper
# ---------------------------------------------------------------------------
def transformer_forward(x, attn_mask, params, n_heads):
    B, S, D = x.shape
    L = params["wq"].shape[0]
    FF = params["w1"].shape[2]

    # >= 2-way parallel grid work for v7x megacore; weights are streamed NB
    # times total (NB=2) instead of B times.
    NB = 2 if (B % 2 == 0 and B >= 2) else 1
    TB = B // NB

    neg = float(jnp.finfo(jnp.float32).min)
    mask_bias = jnp.where(attn_mask.reshape(B, 1, S) == 0, neg, 0.0).astype(jnp.float32)

    weight_names = ["wq", "bq", "wk", "bk", "wv", "bv", "wo", "bo",
                    "ln1_g", "ln1_b", "w1", "b1", "w2", "b2", "ln2_g", "ln2_b"]
    weights = [params[n] for n in weight_names]          # pre-cast; no per-call astype

    def layer_spec(arr):
        return pl.BlockSpec((1,) + arr.shape[1:], lambda bt, l: (l, 0, 0))

    in_specs = ([pl.BlockSpec((TB, S, D), lambda bt, l: (bt, 0, 0)),   # embeddings
                 pl.BlockSpec((TB, 1, S), lambda bt, l: (bt, 0, 0))]   # additive mask bias
                + [layer_spec(w) for w in weights])

    flops = 2 * B * L * S * (4 * D * D + 2 * S * D + 2 * D * FF)
    transcendentals = B * L * S * (n_heads * S + FF + 4)
    weight_bytes = int(sum(int(w.size) * w.dtype.itemsize for w in weights))
    bytes_accessed = int(2 * 4 * B * S * D + 4 * B * S + NB * weight_bytes)

    kernel = functools.partial(transformer_stack_kernel, n_heads=n_heads)

    return pl.pallas_call(
        kernel,
        out_shape=jax.ShapeDtypeStruct((B, S, D), jnp.float32),
        grid=(NB, L),
        in_specs=in_specs,
        out_specs=pl.BlockSpec((TB, S, D), lambda bt, l: (bt, 0, 0)),
        scratch_shapes=[pltpu.VMEM((TB * S, D), jnp.float32)],       # per-head ctx staging
        compiler_params=pltpu.CompilerParams(
            dimension_semantics=("parallel", "arbitrary"),
            vmem_limit_bytes=48 * 1024 * 1024),
        cost_estimate=pl.CostEstimate(flops=flops,
                                      transcendentals=transcendentals,
                                      bytes_accessed=bytes_accessed),
    )(x.astype(jnp.float32), mask_bias, *weights)


# ---------------------------------------------------------------------------
# Pure-JAX reference (mirrors the PyTorch module semantics).
# matmul_dtype=jnp.bfloat16 reproduces the kernel's MXU-operand rounding so
# the kernel can be checked tightly against it; f32 is the module baseline.
# ---------------------------------------------------------------------------
def reference_forward(x, attn_mask, params, n_heads, matmul_dtype=jnp.float32):
    B, S, D = x.shape
    dh = D // n_heads
    L = params["wq"].shape[0]
    hp = jax.lax.Precision.HIGHEST
    neg = jnp.finfo(jnp.float32).min
    md = matmul_dtype

    def layer_norm(v, g, b):
        mu = jnp.mean(v, axis=-1, keepdims=True)
        var = jnp.mean((v - mu) ** 2, axis=-1, keepdims=True)
        return (v - mu) * jax.lax.rsqrt(var + 1e-12) * g + b

    def mm(eq, a, b):
        return jnp.einsum(eq, a.astype(md), b.astype(md), precision=hp,
                          preferred_element_type=jnp.float32)

    h = x
    for l in range(L):
        q = (mm("bsd,de->bse", h, params["wq"][l]) + params["bq"][l]) / math.sqrt(dh)
        k = mm("bsd,de->bse", h, params["wk"][l]) + params["bk"][l]
        v = mm("bsd,de->bse", h, params["wv"][l]) + params["bv"][l]

        def split(t):
            return t.reshape(B, S, n_heads, dh).transpose(0, 2, 1, 3)

        qh, kh, vh = split(q), split(k), split(v)
        scores = mm("bhqd,bhkd->bhqk", qh, kh)
        scores = jnp.where(attn_mask[:, None, None, :] == 0, neg, scores)
        w = jax.nn.softmax(scores, axis=-1)
        ctx = mm("bhqk,bhkd->bhqd", w, vh)
        ctx = ctx.transpose(0, 2, 1, 3).reshape(B, S, D)
        sa = mm("bsd,de->bse", ctx, params["wo"][l]) + params["bo"][l]
        sa = layer_norm(sa + h, params["ln1_g"][l], params["ln1_b"][l])

        h1 = gelu_tanh(mm("bsd,df->bsf", sa, params["w1"][l]) + params["b1"][l])
        ff = mm("bsf,fd->bsd", h1, params["w2"][l]) + params["b2"][l]
        h = layer_norm(ff + sa, params["ln2_g"][l], params["ln2_b"][l])
    return h


if __name__ == "__main__":
    key = jax.random.PRNGKey(0)
    # Lane/sublane friendly toy dims: D multiple of 128, S multiple of 8.
    B, S, D, H, FF, L = 2, 8, 128, 4, 256, 2   # bs, seq, dim, n_heads, hidden_dim, n_layers
    ks = jax.random.split(key, 20)

    def rnd(k, shape, scale):
        return jax.random.normal(k, shape, jnp.float32) * scale

    params = dict(
        wq=rnd(ks[0], (L, D, D), 0.05), bq=rnd(ks[1], (L, 1, D), 0.1),
        wk=rnd(ks[2], (L, D, D), 0.05), bk=rnd(ks[3], (L, 1, D), 0.1),
        wv=rnd(ks[4], (L, D, D), 0.05), bv=rnd(ks[5], (L, 1, D), 0.1),
        wo=rnd(ks[6], (L, D, D), 0.05), bo=rnd(ks[7], (L, 1, D), 0.1),
        ln1_g=1.0 + rnd(ks[8], (L, 1, D), 0.1), ln1_b=rnd(ks[9], (L, 1, D), 0.1),
        w1=rnd(ks[10], (L, D, FF), 0.05), b1=rnd(ks[11], (L, 1, FF), 0.1),
        w2=rnd(ks[12], (L, FF, D), 0.05), b2=rnd(ks[13], (L, 1, D), 0.1),
        ln2_g=1.0 + rnd(ks[14], (L, 1, D), 0.1), ln2_b=rnd(ks[15], (L, 1, D), 0.1),
    )

    x = jax.random.normal(ks[16], (B, S, D), jnp.float32)
    attn_mask = jnp.ones((B, S), jnp.float32)
    attn_mask = attn_mask.at[0, 6:].set(0.0).at[1, 5:].set(0.0)   # some padded positions

    dev_params = prepare_params(params)   # cast/pack once, outside the forward

    out = transformer_forward(x, attn_mask, dev_params, n_heads=H)
    out = jax.block_until_ready(out)
    assert out.shape == (B, S, D), out.shape

    # Tight check against a reference with the SAME bf16 MXU-operand rounding
    # (catches structural bugs independent of precision choices).
    ref_bf16 = reference_forward(x, attn_mask, params, n_heads=H,
                                 matmul_dtype=jnp.bfloat16)
    err_bf16 = float(jnp.max(jnp.abs(out - ref_bf16)))
    assert jnp.allclose(out, ref_bf16, atol=2e-2, rtol=2e-2), err_bf16

    # Loose check against the full-f32 module-semantics baseline (bounds the
    # total bf16 precision loss).
    ref_f32 = reference_forward(x, attn_mask, params, n_heads=H)
    err_f32 = float(jnp.max(jnp.abs(out - ref_f32)))
    assert jnp.allclose(out, ref_f32, atol=1e-1, rtol=1e-1), err_f32

    print("KERNEL_OK")
</pallas_src>

<mosaic_0001>
module attributes {stable_mosaic.version = 11 : i64} {
  func.func @transformer_stack_kernel(%arg0: i32, %arg1: i32, %arg2: memref<1x8x128xf32, #tpu.memory_space<vmem>>, %arg3: memref<1x1x8xf32, #tpu.memory_space<vmem>>, %arg4: memref<1x128x128xbf16, #tpu.memory_space<vmem>>, %arg5: memref<1x1x128xf32, #tpu.memory_space<vmem>>, %arg6: memref<1x128x128xbf16, #tpu.memory_space<vmem>>, %arg7: memref<1x1x128xf32, #tpu.memory_space<vmem>>, %arg8: memref<1x128x128xbf16, #tpu.memory_space<vmem>>, %arg9: memref<1x1x128xf32, #tpu.memory_space<vmem>>, %arg10: memref<1x128x128xbf16, #tpu.memory_space<vmem>>, %arg11: memref<1x1x128xf32, #tpu.memory_space<vmem>>, %arg12: memref<1x1x128xf32, #tpu.memory_space<vmem>>, %arg13: memref<1x1x128xf32, #tpu.memory_space<vmem>>, %arg14: memref<1x128x256xbf16, #tpu.memory_space<vmem>>, %arg15: memref<1x1x256xf32, #tpu.memory_space<vmem>>, %arg16: memref<1x256x128xbf16, #tpu.memory_space<vmem>>, %arg17: memref<1x1x128xf32, #tpu.memory_space<vmem>>, %arg18: memref<1x1x128xf32, #tpu.memory_space<vmem>>, %arg19: memref<1x1x128xf32, #tpu.memory_space<vmem>>, %arg20: memref<1x8x128xf32, #tpu.memory_space<vmem>>, %arg21: memref<8x128xf32, #tpu.memory_space<vmem>>) attributes {dimension_semantics = [#tpu.dimension_semantics<parallel>, #tpu.dimension_semantics<arbitrary>], iteration_bounds = array<i64: 2, 2>, scalar_prefetch = 0 : i64, scratch_operands = 1 : i64, tpu.core_type = #tpu.core_type<tc>, window_params = [{transform_indices = @transform_0, window_bounds = array<i64: 1, 8, 128>}, {transform_indices = @transform_1, window_bounds = array<i64: 1, 1, 8>}, {transform_indices = @transform_2, window_bounds = array<i64: 1, 128, 128>}, {transform_indices = @transform_3, window_bounds = array<i64: 1, 1, 128>}, {transform_indices = @transform_4, window_bounds = array<i64: 1, 128, 128>}, {transform_indices = @transform_5, window_bounds = array<i64: 1, 1, 128>}, {transform_indices = @transform_6, window_bounds = array<i64: 1, 128, 128>}, {transform_indices = @transform_7, window_bounds = array<i64: 1, 1, 128>}, {transform_indices = @transform_8, window_bounds = array<i64: 1, 128, 128>}, {transform_indices = @transform_9, window_bounds = array<i64: 1, 1, 128>}, {transform_indices = @transform_10, window_bounds = array<i64: 1, 1, 128>}, {transform_indices = @transform_11, window_bounds = array<i64: 1, 1, 128>}, {transform_indices = @transform_12, window_bounds = array<i64: 1, 128, 256>}, {transform_indices = @transform_13, window_bounds = array<i64: 1, 1, 256>}, {transform_indices = @transform_14, window_bounds = array<i64: 1, 256, 128>}, {transform_indices = @transform_15, window_bounds = array<i64: 1, 1, 128>}, {transform_indices = @transform_16, window_bounds = array<i64: 1, 1, 128>}, {transform_indices = @transform_17, window_bounds = array<i64: 1, 1, 128>}, {transform_indices = @transform_18, window_bounds = array<i64: 1, 8, 128>}]} {
    %c0_i32 = arith.constant 0 : i32
    %0 = arith.cmpi eq, %arg1, %c0_i32 : i32
    %1 = arith.extui %0 : i1 to i32
    %c0_i32_0 = arith.constant 0 : i32
    %2 = arith.cmpi ne, %1, %c0_i32_0 : i32
    scf.if %2 {
      %c0_100 = arith.constant 0 : index
      %c0_101 = arith.constant 0 : index
      %c0_102 = arith.constant 0 : index
      %213 = vector.load %arg2[%c0_100, %c0_101, %c0_102] : memref<1x8x128xf32, #tpu.memory_space<vmem>>, vector<1x8x128xf32>
      %c0_103 = arith.constant 0 : index
      %c0_104 = arith.constant 0 : index
      %c0_105 = arith.constant 0 : index
      %214 = vector.load %arg20[%c0_103, %c0_104, %c0_105] : memref<1x8x128xf32, #tpu.memory_space<vmem>>, vector<1x8x128xf32>
      tpu.vector_store %arg20[%c0_103, %c0_104, %c0_105], %213 {strides = array<i32>} : memref<1x8x128xf32, #tpu.memory_space<vmem>>, vector<1x8x128xf32>,
    } else {
    }
    %c0 = arith.constant 0 : index
    %c0_1 = arith.constant 0 : index
    %c0_2 = arith.constant 0 : index
    %3 = vector.load %arg20[%c0, %c0_1, %c0_2] : memref<1x8x128xf32, #tpu.memory_space<vmem>>, vector<1x8x128xf32>
    %4 = vector.shape_cast %3 : vector<1x8x128xf32> to vector<8x128xf32>
    %5 = arith.truncf %4 : vector<8x128xf32> to vector<8x128xbf16>
    %c0_3 = arith.constant 0 : index
    %c0_4 = arith.constant 0 : index
    %c0_5 = arith.constant 0 : index
    %6 = vector.load %arg4[%c0_3, %c0_4, %c0_5] : memref<1x128x128xbf16, #tpu.memory_space<vmem>>, vector<1x128x128xbf16>
    %7 = vector.shape_cast %6 : vector<1x128x128xbf16> to vector<128x128xbf16>
    %cst = arith.constant dense<0.000000e+00> : vector<8x128xf32>
    %8 = tpu.matmul %5, %7, %cst {dimension_numbers = #tpu.dot_dimension_numbers<[1], [0], [0], [1], [0, 0, 1, 1], [], []>} : vector<8x128xbf16>, vector<128x128xbf16>, vector<8x128xf32> -> vector<8x128xf32>
    %c0_6 = arith.constant 0 : index
    %c0_7 = arith.constant 0 : index
    %c0_8 = arith.constant 0 : index
    %9 = vector.load %arg5[%c0_6, %c0_7, %c0_8] : memref<1x1x128xf32, #tpu.memory_space<vmem>>, vector<1x1x128xf32>
    %10 = vector.shape_cast %9 : vector<1x1x128xf32> to vector<1x128xf32>
    %11 = vector.broadcast %10 : vector<1x128xf32> to vector<8x128xf32>
    %12 = arith.addf %8, %11 : vector<8x128xf32>
    %cst_9 = arith.constant 0.176776692 : f32
    %13 = vector.broadcast %cst_9 : f32 to vector<8x128xf32>
    %14 = arith.mulf %12, %13 : vector<8x128xf32>
    %c0_10 = arith.constant 0 : index
    %c0_11 = arith.constant 0 : index
    %c0_12 = arith.constant 0 : index
    %15 = vector.load %arg6[%c0_10, %c0_11, %c0_12] : memref<1x128x128xbf16, #tpu.memory_space<vmem>>, vector<1x128x128xbf16>
    %16 = vector.shape_cast %15 : vector<1x128x128xbf16> to vector<128x128xbf16>
    %cst_13 = arith.constant dense<0.000000e+00> : vector<8x128xf32>
    %17 = tpu.matmul %5, %16, %cst_13 {dimension_numbers = #tpu.dot_dimension_numbers<[1], [0], [0], [1], [0, 0, 1, 1], [], []>} : vector<8x128xbf16>, vector<128x128xbf16>, vector<8x128xf32> -> vector<8x128xf32>
    %c0_14 = arith.constant 0 : index
    %c0_15 = arith.constant 0 : index
    %c0_16 = arith.constant 0 : index
    %18 = vector.load %arg7[%c0_14, %c0_15, %c0_16] : memref<1x1x128xf32, #tpu.memory_space<vmem>>, vector<1x1x128xf32>
    %19 = vector.shape_cast %18 : vector<1x1x128xf32> to vector<1x128xf32>
    %20 = vector.broadcast %19 : vector<1x128xf32> to vector<8x128xf32>
    %21 = arith.addf %17, %20 : vector<8x128xf32>
    %c0_17 = arith.constant 0 : index
    %c0_18 = arith.constant 0 : index
    %c0_19 = arith.constant 0 : index
    %22 = vector.load %arg8[%c0_17, %c0_18, %c0_19] : memref<1x128x128xbf16, #tpu.memory_space<vmem>>, vector<1x128x128xbf16>
    %23 = vector.shape_cast %22 : vector<1x128x128xbf16> to vector<128x128xbf16>
    %cst_20 = arith.constant dense<0.000000e+00> : vector<8x128xf32>
    %24 = tpu.matmul %5, %23, %cst_20 {dimension_numbers = #tpu.dot_dimension_numbers<[1], [0], [0], [1], [0, 0, 1, 1], [], []>} : vector<8x128xbf16>, vector<128x128xbf16>, vector<8x128xf32> -> vector<8x128xf32>
    %c0_21 = arith.constant 0 : index
    %c0_22 = arith.constant 0 : index
    %c0_23 = arith.constant 0 : index
    %25 = vector.load %arg9[%c0_21, %c0_22, %c0_23] : memref<1x1x128xf32, #tpu.memory_space<vmem>>, vector<1x1x128xf32>
    %26 = vector.shape_cast %25 : vector<1x1x128xf32> to vector<1x128xf32>
    %27 = vector.broadcast %26 : vector<1x128xf32> to vector<8x128xf32>
    %28 = arith.addf %24, %27 : vector<8x128xf32>
    %c0_24 = arith.constant 0 : index
    %c0_25 = arith.constant 0 : index
    %c0_26 = arith.constant 0 : index
    %29 = vector.load %arg3[%c0_24, %c0_25, %c0_26] : memref<1x1x8xf32, #tpu.memory_space<vmem>>, vector<1x1x8xf32>
    %30 = vector.shape_cast %29 : vector<1x1x8xf32> to vector<1x8xf32>
    %31 = vector.extract_strided_slice %14 {offsets = [0, 0], sizes = [8, 32], strides = [1, 1]} : vector<8x128xf32> to vector<8x32xf32>
    %32 = arith.truncf %31 : vector<8x32xf32> to vector<8x32xbf16>
    %33 = vector.extract_strided_slice %21 {offsets = [0, 0], sizes = [8, 32], strides = [1, 1]} : vector<8x128xf32> to vector<8x32xf32>
    %34 = arith.truncf %33 : vector<8x32xf32> to vector<8x32xbf16>
    %35 = vector.extract_strided_slice %28 {offsets = [0, 0], sizes = [8, 32], strides = [1, 1]} : vector<8x128xf32> to vector<8x32xf32>
    %36 = arith.truncf %35 : vector<8x32xf32> to vector<8x32xbf16>
    %cst_27 = arith.constant dense<0.000000e+00> : vector<8x8xf32>
    %37 = tpu.matmul %32, %34, %cst_27 {dimension_numbers = #tpu.dot_dimension_numbers<[1], [1], [0], [0], [0, 0, 1, 0], [], []>} : vector<8x32xbf16>, vector<8x32xbf16>, vector<8x8xf32> -> vector<8x8xf32>
    %38 = vector.broadcast %30 : vector<1x8xf32> to vector<8x8xf32>
    %39 = arith.addf %37, %38 : vector<8x8xf32>
    %cst_28 = arith.constant dense<0xFF800000> : vector<8xf32>
    %40 = vector.multi_reduction <maximumf>, %39, %cst_28 [1] : vector<8x8xf32> to vector<8xf32>
    %41 = vector.shape_cast %40 : vector<8xf32> to vector<8x1xf32>
    %42 = vector.broadcast %41 : vector<8x1xf32> to vector<8x8xf32>
    %43 = arith.subf %39, %42 : vector<8x8xf32>
    %44 = math.exp %43 : vector<8x8xf32>
    %cst_29 = arith.constant dense<0.000000e+00> : vector<8xf32>
    %45 = vector.multi_reduction <add>, %44, %cst_29 [1] : vector<8x8xf32> to vector<8xf32>
    %46 = vector.shape_cast %45 : vector<8xf32> to vector<8x1xf32>
    %47 = tpu.reciprocal %46 {approx = true} : vector<8x1xf32> -> vector<8x1xf32>
    %48 = vector.broadcast %47 : vector<8x1xf32> to vector<8x8xf32>
    %49 = arith.mulf %44, %48 : vector<8x8xf32>
    %50 = arith.truncf %49 : vector<8x8xf32> to vector<8x8xbf16>
    %cst_30 = arith.constant dense<0.000000e+00> : vector<8x32xf32>
    %51 = tpu.matmul %50, %36, %cst_30 {dimension_numbers = #tpu.dot_dimension_numbers<[1], [0], [0], [1], [0, 0, 1, 1], [], []>} : vector<8x8xbf16>, vector<8x32xbf16>, vector<8x32xf32> -> vector<8x32xf32>
    %c0_31 = arith.constant 0 : index
    %c0_32 = arith.constant 0 : index
    %52 = vector.load %arg21[%c0_31, %c0_32] : memref<8x128xf32, #tpu.memory_space<vmem>>, vector<8x32xf32>
    tpu.vector_store %arg21[%c0_31, %c0_32], %51 {strides = array<i32>} : memref<8x128xf32, #tpu.memory_space<vmem>>, vector<8x32xf32>,
    %53 = vector.extract_strided_slice %14 {offsets = [0, 32], sizes = [8, 32], strides = [1, 1]} : vector<8x128xf32> to vector<8x32xf32>
    %54 = arith.truncf %53 : vector<8x32xf32> to vector<8x32xbf16>
    %55 = vector.extract_strided_slice %21 {offsets = [0, 32], sizes = [8, 32], strides = [1, 1]} : vector<8x128xf32> to vector<8x32xf32>
    %56 = arith.truncf %55 : vector<8x32xf32> to vector<8x32xbf16>
    %57 = vector.extract_strided_slice %28 {offsets = [0, 32], sizes = [8, 32], strides = [1, 1]} : vector<8x128xf32> to vector<8x32xf32>
    %58 = arith.truncf %57 : vector<8x32xf32> to vector<8x32xbf16>
    %cst_33 = arith.constant dense<0.000000e+00> : vector<8x8xf32>
    %59 = tpu.matmul %54, %56, %cst_33 {dimension_numbers = #tpu.dot_dimension_numbers<[1], [1], [0], [0], [0, 0, 1, 0], [], []>} : vector<8x32xbf16>, vector<8x32xbf16>, vector<8x8xf32> -> vector<8x8xf32>
    %60 = vector.broadcast %30 : vector<1x8xf32> to vector<8x8xf32>
    %61 = arith.addf %59, %60 : vector<8x8xf32>
    %cst_34 = arith.constant dense<0xFF800000> : vector<8xf32>
    %62 = vector.multi_reduction <maximumf>, %61, %cst_34 [1] : vector<8x8xf32> to vector<8xf32>
    %63 = vector.shape_cast %62 : vector<8xf32> to vector<8x1xf32>
    %64 = vector.broadcast %63 : vector<8x1xf32> to vector<8x8xf32>
    %65 = arith.subf %61, %64 : vector<8x8xf32>
    %66 = math.exp %65 : vector<8x8xf32>
    %cst_35 = arith.constant dense<0.000000e+00> : vector<8xf32>
    %67 = vector.multi_reduction <add>, %66, %cst_35 [1] : vector<8x8xf32> to vector<8xf32>
    %68 = vector.shape_cast %67 : vector<8xf32> to vector<8x1xf32>
    %69 = tpu.reciprocal %68 {approx = true} : vector<8x1xf32> -> vector<8x1xf32>
    %70 = vector.broadcast %69 : vector<8x1xf32> to vector<8x8xf32>
    %71 = arith.mulf %66, %70 : vector<8x8xf32>
    %72 = arith.truncf %71 : vector<8x8xf32> to vector<8x8xbf16>
    %cst_36 = arith.constant dense<0.000000e+00> : vector<8x32xf32>
    %73 = tpu.matmul %72, %58, %cst_36 {dimension_numbers = #tpu.dot_dimension_numbers<[1], [0], [0], [1], [0, 0, 1, 1], [], []>} : vector<8x8xbf16>, vector<8x32xbf16>, vector<8x32xf32> -> vector<8x32xf32>
    %c0_37 = arith.constant 0 : index
    %c32 = arith.constant 32 : index
    %74 = vector.load %arg21[%c0_37, %c32] : memref<8x128xf32, #tpu.memory_space<vmem>>, vector<8x32xf32>
    tpu.vector_store %arg21[%c0_37, %c32], %73 {strides = array<i32>} : memref<8x128xf32, #tpu.memory_space<vmem>>, vector<8x32xf32>,
    %75 = vector.extract_strided_slice %14 {offsets = [0, 64], sizes = [8, 32], strides = [1, 1]} : vector<8x128xf32> to vector<8x32xf32>
    %76 = arith.truncf %75 : vector<8x32xf32> to vector<8x32xbf16>
    %77 = vector.extract_strided_slice %21 {offsets = [0, 64], sizes = [8, 32], strides = [1, 1]} : vector<8x128xf32> to vector<8x32xf32>
    %78 = arith.truncf %77 : vector<8x32xf32> to vector<8x32xbf16>
    %79 = vector.extract_strided_slice %28 {offsets = [0, 64], sizes = [8, 32], strides = [1, 1]} : vector<8x128xf32> to vector<8x32xf32>
    %80 = arith.truncf %79 : vector<8x32xf32> to vector<8x32xbf16>
    %cst_38 = arith.constant dense<0.000000e+00> : vector<8x8xf32>
    %81 = tpu.matmul %76, %78, %cst_38 {dimension_numbers = #tpu.dot_dimension_numbers<[1], [1], [0], [0], [0, 0, 1, 0], [], []>} : vector<8x32xbf16>, vector<8x32xbf16>, vector<8x8xf32> -> vector<8x8xf32>
    %82 = vector.broadcast %30 : vector<1x8xf32> to vector<8x8xf32>
    %83 = arith.addf %81, %82 : vector<8x8xf32>
    %cst_39 = arith.constant dense<0xFF800000> : vector<8xf32>
    %84 = vector.multi_reduction <maximumf>, %83, %cst_39 [1] : vector<8x8xf32> to vector<8xf32>
    %85 = vector.shape_cast %84 : vector<8xf32> to vector<8x1xf32>
    %86 = vector.broadcast %85 : vector<8x1xf32> to vector<8x8xf32>
    %87 = arith.subf %83, %86 : vector<8x8xf32>
    %88 = math.exp %87 : vector<8x8xf32>
    %cst_40 = arith.constant dense<0.000000e+00> : vector<8xf32>
    %89 = vector.multi_reduction <add>, %88, %cst_40 [1] : vector<8x8xf32> to vector<8xf32>
    %90 = vector.shape_cast %89 : vector<8xf32> to vector<8x1xf32>
    %91 = tpu.reciprocal %90 {approx = true} : vector<8x1xf32> -> vector<8x1xf32>
    %92 = vector.broadcast %91 : vector<8x1xf32> to vector<8x8xf32>
    %93 = arith.mulf %88, %92 : vector<8x8xf32>
    %94 = arith.truncf %93 : vector<8x8xf32> to vector<8x8xbf16>
    %cst_41 = arith.constant dense<0.000000e+00> : vector<8x32xf32>
    %95 = tpu.matmul %94, %80, %cst_41 {dimension_numbers = #tpu.dot_dimension_numbers<[1], [0], [0], [1], [0, 0, 1, 1], [], []>} : vector<8x8xbf16>, vector<8x32xbf16>, vector<8x32xf32> -> vector<8x32xf32>
    %c0_42 = arith.constant 0 : index
    %c64 = arith.constant 64 : index
    %96 = vector.load %arg21[%c0_42, %c64] : memref<8x128xf32, #tpu.memory_space<vmem>>, vector<8x32xf32>
    tpu.vector_store %arg21[%c0_42, %c64], %95 {strides = array<i32>} : memref<8x128xf32, #tpu.memory_space<vmem>>, vector<8x32xf32>,
    %97 = vector.extract_strided_slice %14 {offsets = [0, 96], sizes = [8, 32], strides = [1, 1]} : vector<8x128xf32> to vector<8x32xf32>
    %98 = arith.truncf %97 : vector<8x32xf32> to vector<8x32xbf16>
    %99 = vector.extract_strided_slice %21 {offsets = [0, 96], sizes = [8, 32], strides = [1, 1]} : vector<8x128xf32> to vector<8x32xf32>
    %100 = arith.truncf %99 : vector<8x32xf32> to vector<8x32xbf16>
    %101 = vector.extract_strided_slice %28 {offsets = [0, 96], sizes = [8, 32], strides = [1, 1]} : vector<8x128xf32> to vector<8x32xf32>
    %102 = arith.truncf %101 : vector<8x32xf32> to vector<8x32xbf16>
    %cst_43 = arith.constant dense<0.000000e+00> : vector<8x8xf32>
    %103 = tpu.matmul %98, %100, %cst_43 {dimension_numbers = #tpu.dot_dimension_numbers<[1], [1], [0], [0], [0, 0, 1, 0], [], []>} : vector<8x32xbf16>, vector<8x32xbf16>, vector<8x8xf32> -> vector<8x8xf32>
    %104 = vector.broadcast %30 : vector<1x8xf32> to vector<8x8xf32>
    %105 = arith.addf %103, %104 : vector<8x8xf32>
    %cst_44 = arith.constant dense<0xFF800000> : vector<8xf32>
    %106 = vector.multi_reduction <maximumf>, %105, %cst_44 [1] : vector<8x8xf32> to vector<8xf32>
    %107 = vector.shape_cast %106 : vector<8xf32> to vector<8x1xf32>
    %108 = vector.broadcast %107 : vector<8x1xf32> to vector<8x8xf32>
    %109 = arith.subf %105, %108 : vector<8x8xf32>
    %110 = math.exp %109 : vector<8x8xf32>
    %cst_45 = arith.constant dense<0.000000e+00> : vector<8xf32>
    %111 = vector.multi_reduction <add>, %110, %cst_45 [1] : vector<8x8xf32> to vector<8xf32>
    %112 = vector.shape_cast %111 : vector<8xf32> to vector<8x1xf32>
    %113 = tpu.reciprocal %112 {approx = true} : vector<8x1xf32> -> vector<8x1xf32>
    %114 = vector.broadcast %113 : vector<8x1xf32> to vector<8x8xf32>
    %115 = arith.mulf %110, %114 : vector<8x8xf32>
    %116 = arith.truncf %115 : vector<8x8xf32> to vector<8x8xbf16>
    %cst_46 = arith.constant dense<0.000000e+00> : vector<8x32xf32>
    %117 = tpu.matmul %116, %102, %cst_46 {dimension_numbers = #tpu.dot_dimension_numbers<[1], [0], [0], [1], [0, 0, 1, 1], [], []>} : vector<8x8xbf16>, vector<8x32xbf16>, vector<8x32xf32> -> vector<8x32xf32>
    %c0_47 = arith.constant 0 : index
    %c96 = arith.constant 96 : index
    %118 = vector.load %arg21[%c0_47, %c96] : memref<8x128xf32, #tpu.memory_space<vmem>>, vector<8x32xf32>
    tpu.vector_store %arg21[%c0_47, %c96], %117 {strides = array<i32>} : memref<8x128xf32, #tpu.memory_space<vmem>>, vector<8x32xf32>,
    %c0_48 = arith.constant 0 : index
    %c0_49 = arith.constant 0 : index
    %119 = vector.load %arg21[%c0_48, %c0_49] : memref<8x128xf32, #tpu.memory_space<vmem>>, vector<8x128xf32>
    %120 = arith.truncf %119 : vector<8x128xf32> to vector<8x128xbf16>
    %c0_50 = arith.constant 0 : index
    %c0_51 = arith.constant 0 : index
    %c0_52 = arith.constant 0 : index
    %121 = vector.load %arg10[%c0_50, %c0_51, %c0_52] : memref<1x128x128xbf16, #tpu.memory_space<vmem>>, vector<1x128x128xbf16>
    %122 = vector.shape_cast %121 : vector<1x128x128xbf16> to vector<128x128xbf16>
    %cst_53 = arith.constant dense<0.000000e+00> : vector<8x128xf32>
    %123 = tpu.matmul %120, %122, %cst_53 {dimension_numbers = #tpu.dot_dimension_numbers<[1], [0], [0], [1], [0, 0, 1, 1], [], []>} : vector<8x128xbf16>, vector<128x128xbf16>, vector<8x128xf32> -> vector<8x128xf32>
    %c0_54 = arith.constant 0 : index
    %c0_55 = arith.constant 0 : index
    %c0_56 = arith.constant 0 : index
    %124 = vector.load %arg11[%c0_54, %c0_55, %c0_56] : memref<1x1x128xf32, #tpu.memory_space<vmem>>, vector<1x1x128xf32>
    %125 = vector.shape_cast %124 : vector<1x1x128xf32> to vector<1x128xf32>
    %126 = vector.broadcast %125 : vector<1x128xf32> to vector<8x128xf32>
    %127 = arith.addf %123, %126 : vector<8x128xf32>
    %128 = arith.addf %127, %4 : vector<8x128xf32>
    %cst_57 = arith.constant dense<0.000000e+00> : vector<8xf32>
    %129 = vector.multi_reduction <add>, %128, %cst_57 [1] : vector<8x128xf32> to vector<8xf32>
    %130 = vector.shape_cast %129 : vector<8xf32> to vector<8x1xf32>
    %cst_58 = arith.constant 1.280000e+02 : f32
    %131 = vector.broadcast %cst_58 : f32 to vector<8x1xf32>
    %132 = arith.divf %130, %131 : vector<8x1xf32>
    %133 = vector.broadcast %132 : vector<8x1xf32> to vector<8x128xf32>
    %134 = arith.subf %128, %133 : vector<8x128xf32>
    %135 = arith.mulf %134, %134 : vector<8x128xf32>
    %cst_59 = arith.constant dense<0.000000e+00> : vector<8xf32>
    %136 = vector.multi_reduction <add>, %135, %cst_59 [1] : vector<8x128xf32> to vector<8xf32>
    %137 = vector.shape_cast %136 : vector<8xf32> to vector<8x1xf32>
    %cst_60 = arith.constant 1.280000e+02 : f32
    %138 = vector.broadcast %cst_60 : f32 to vector<8x1xf32>
    %139 = arith.divf %137, %138 : vector<8x1xf32>
    %140 = vector.broadcast %132 : vector<8x1xf32> to vector<8x128xf32>
    %141 = arith.subf %128, %140 : vector<8x128xf32>
    %cst_61 = arith.constant 9.99999996E-13 : f32
    %142 = vector.broadcast %cst_61 : f32 to vector<8x1xf32>
    %143 = arith.addf %139, %142 : vector<8x1xf32>
    %144 = math.rsqrt %143 : vector<8x1xf32>
    %145 = vector.broadcast %144 : vector<8x1xf32> to vector<8x128xf32>
    %146 = arith.mulf %141, %145 : vector<8x128xf32>
    %c0_62 = arith.constant 0 : index
    %c0_63 = arith.constant 0 : index
    %c0_64 = arith.constant 0 : index
    %147 = vector.load %arg12[%c0_62, %c0_63, %c0_64] : memref<1x1x128xf32, #tpu.memory_space<vmem>>, vector<1x1x128xf32>
    %148 = vector.shape_cast %147 : vector<1x1x128xf32> to vector<1x128xf32>
    %149 = vector.broadcast %148 : vector<1x128xf32> to vector<8x128xf32>
    %150 = arith.mulf %146, %149 : vector<8x128xf32>
    %c0_65 = arith.constant 0 : index
    %c0_66 = arith.constant 0 : index
    %c0_67 = arith.constant 0 : index
    %151 = vector.load %arg13[%c0_65, %c0_66, %c0_67] : memref<1x1x128xf32, #tpu.memory_space<vmem>>, vector<1x1x128xf32>
    %152 = vector.shape_cast %151 : vector<1x1x128xf32> to vector<1x128xf32>
    %153 = vector.broadcast %152 : vector<1x128xf32> to vector<8x128xf32>
    %154 = arith.addf %150, %153 : vector<8x128xf32>
    %155 = arith.truncf %154 : vector<8x128xf32> to vector<8x128xbf16>
    %c0_68 = arith.constant 0 : index
    %c0_69 = arith.constant 0 : index
    %c0_70 = arith.constant 0 : index
    %156 = vector.load %arg14[%c0_68, %c0_69, %c0_70] : memref<1x128x256xbf16, #tpu.memory_space<vmem>>, vector<1x128x256xbf16>
    %157 = vector.shape_cast %156 : vector<1x128x256xbf16> to vector<128x256xbf16>
    %cst_71 = arith.constant dense<0.000000e+00> : vector<8x256xf32>
    %158 = tpu.matmul %155, %157, %cst_71 {dimension_numbers = #tpu.dot_dimension_numbers<[1], [0], [0], [1], [0, 0, 1, 1], [], []>} : vector<8x128xbf16>, vector<128x256xbf16>, vector<8x256xf32> -> vector<8x256xf32>
    %c0_72 = arith.constant 0 : index
    %c0_73 = arith.constant 0 : index
    %c0_74 = arith.constant 0 : index
    %159 = vector.load %arg15[%c0_72, %c0_73, %c0_74] : memref<1x1x256xf32, #tpu.memory_space<vmem>>, vector<1x1x256xf32>
    %160 = vector.shape_cast %159 : vector<1x1x256xf32> to vector<1x256xf32>
    %161 = vector.broadcast %160 : vector<1x256xf32> to vector<8x256xf32>
    %162 = arith.addf %158, %161 : vector<8x256xf32>
    %cst_75 = arith.constant 5.000000e-01 : f32
    %163 = vector.broadcast %cst_75 : f32 to vector<8x256xf32>
    %164 = arith.mulf %163, %162 : vector<8x256xf32>
    %cst_76 = arith.constant 4.471500e-02 : f32
    %165 = vector.broadcast %cst_76 : f32 to vector<8x256xf32>
    %166 = arith.mulf %165, %162 : vector<8x256xf32>
    %167 = arith.mulf %166, %162 : vector<8x256xf32>
    %168 = arith.mulf %167, %162 : vector<8x256xf32>
    %169 = arith.addf %162, %168 : vector<8x256xf32>
    %cst_77 = arith.constant 0.797884583 : f32
    %170 = vector.broadcast %cst_77 : f32 to vector<8x256xf32>
    %171 = arith.mulf %170, %169 : vector<8x256xf32>
    %172 = math.tanh %171 : vector<8x256xf32>
    %cst_78 = arith.constant 1.000000e+00 : f32
    %173 = vector.broadcast %cst_78 : f32 to vector<8x256xf32>
    %174 = arith.addf %173, %172 : vector<8x256xf32>
    %175 = arith.mulf %164, %174 : vector<8x256xf32>
    %176 = arith.truncf %175 : vector<8x256xf32> to vector<8x256xbf16>
    %c0_79 = arith.constant 0 : index
    %c0_80 = arith.constant 0 : index
    %c0_81 = arith.constant 0 : index
    %177 = vector.load %arg16[%c0_79, %c0_80, %c0_81] : memref<1x256x128xbf16, #tpu.memory_space<vmem>>, vector<1x256x128xbf16>
    %178 = vector.shape_cast %177 : vector<1x256x128xbf16> to vector<256x128xbf16>
    %cst_82 = arith.constant dense<0.000000e+00> : vector<8x128xf32>
    %179 = tpu.matmul %176, %178, %cst_82 {dimension_numbers = #tpu.dot_dimension_numbers<[1], [0], [0], [1], [0, 0, 1, 1], [], []>} : vector<8x256xbf16>, vector<256x128xbf16>, vector<8x128xf32> -> vector<8x128xf32>
    %c0_83 = arith.constant 0 : index
    %c0_84 = arith.constant 0 : index
    %c0_85 = arith.constant 0 : index
    %180 = vector.load %arg17[%c0_83, %c0_84, %c0_85] : memref<1x1x128xf32, #tpu.memory_space<vmem>>, vector<1x1x128xf32>
    %181 = vector.shape_cast %180 : vector<1x1x128xf32> to vector<1x128xf32>
    %182 = vector.broadcast %181 : vector<1x128xf32> to vector<8x128xf32>
    %183 = arith.addf %179, %182 : vector<8x128xf32>
    %184 = arith.addf %183, %154 : vector<8x128xf32>
    %cst_86 = arith.constant dense<0.000000e+00> : vector<8xf32>
    %185 = vector.multi_reduction <add>, %184, %cst_86 [1] : vector<8x128xf32> to vector<8xf32>
    %186 = vector.shape_cast %185 : vector<8xf32> to vector<8x1xf32>
    %cst_87 = arith.constant 1.280000e+02 : f32
    %187 = vector.broadcast %cst_87 : f32 to vector<8x1xf32>
    %188 = arith.divf %186, %187 : vector<8x1xf32>
    %189 = vector.broadcast %188 : vector<8x1xf32> to vector<8x128xf32>
    %190 = arith.subf %184, %189 : vector<8x128xf32>
    %191 = arith.mulf %190, %190 : vector<8x128xf32>
    %cst_88 = arith.constant dense<0.000000e+00> : vector<8xf32>
    %192 = vector.multi_reduction <add>, %191, %cst_88 [1] : vector<8x128xf32> to vector<8xf32>
    %193 = vector.shape_cast %192 : vector<8xf32> to vector<8x1xf32>
    %cst_89 = arith.constant 1.280000e+02 : f32
    %194 = vector.broadcast %cst_89 : f32 to vector<8x1xf32>
    %195 = arith.divf %193, %194 : vector<8x1xf32>
    %196 = vector.broadcast %188 : vector<8x1xf32> to vector<8x128xf32>
    %197 = arith.subf %184, %196 : vector<8x128xf32>
    %cst_90 = arith.constant 9.99999996E-13 : f32
    %198 = vector.broadcast %cst_90 : f32 to vector<8x1xf32>
    %199 = arith.addf %195, %198 : vector<8x1xf32>
    %200 = math.rsqrt %199 : vector<8x1xf32>
    %201 = vector.broadcast %200 : vector<8x1xf32> to vector<8x128xf32>
    %202 = arith.mulf %197, %201 : vector<8x128xf32>
    %c0_91 = arith.constant 0 : index
    %c0_92 = arith.constant 0 : index
    %c0_93 = arith.constant 0 : index
    %203 = vector.load %arg18[%c0_91, %c0_92, %c0_93] : memref<1x1x128xf32, #tpu.memory_space<vmem>>, vector<1x1x128xf32>
    %204 = vector.shape_cast %203 : vector<1x1x128xf32> to vector<1x128xf32>
    %205 = vector.broadcast %204 : vector<1x128xf32> to vector<8x128xf32>
    %206 = arith.mulf %202, %205 : vector<8x128xf32>
    %c0_94 = arith.constant 0 : index
    %c0_95 = arith.constant 0 : index
    %c0_96 = arith.constant 0 : index
    %207 = vector.load %arg19[%c0_94, %c0_95, %c0_96] : memref<1x1x128xf32, #tpu.memory_space<vmem>>, vector<1x1x128xf32>
    %208 = vector.shape_cast %207 : vector<1x1x128xf32> to vector<1x128xf32>
    %209 = vector.broadcast %208 : vector<1x128xf32> to vector<8x128xf32>
    %210 = arith.addf %206, %209 : vector<8x128xf32>
    %211 = vector.shape_cast %210 : vector<8x128xf32> to vector<1x8x128xf32>
    %c0_97 = arith.constant 0 : index
    %c0_98 = arith.constant 0 : index
    %c0_99 = arith.constant 0 : index
    %212 = vector.load %arg20[%c0_97, %c0_98, %c0_99] : memref<1x8x128xf32, #tpu.memory_space<vmem>>, vector<1x8x128xf32>
    tpu.vector_store %arg20[%c0_97, %c0_98, %c0_99], %211 {strides = array<i32>} : memref<1x8x128xf32, #tpu.memory_space<vmem>>, vector<1x8x128xf32>,
    return
  }
  func.func @transform_0(%arg0: i32, %arg1: i32) -> (i32, i32, i32) {
    %c0_i32 = arith.constant 0 : i32
    %c0_i32_0 = arith.constant 0 : i32
    %c0_i32_1 = arith.constant 0 : i32
    return %arg0, %c0_i32, %c0_i32_0 : i32, i32, i32
  }
  func.func @transform_1(%arg0: i32, %arg1: i32) -> (i32, i32, i32) {
    %c0_i32 = arith.constant 0 : i32
    %c0_i32_0 = arith.constant 0 : i32
    %c0_i32_1 = arith.constant 0 : i32
    return %arg0, %c0_i32, %c0_i32_0 : i32, i32, i32
  }
  func.func @transform_2(%arg0: i32, %arg1: i32) -> (i32, i32, i32) {
    %c0_i32 = arith.constant 0 : i32
    %c0_i32_0 = arith.constant 0 : i32
    %c0_i32_1 = arith.constant 0 : i32
    return %arg1, %c0_i32, %c0_i32_0 : i32, i32, i32
  }
  func.func @transform_3(%arg0: i32, %arg1: i32) -> (i32, i32, i32) {
    %c0_i32 = arith.constant 0 : i32
    %c0_i32_0 = arith.constant 0 : i32
    %c0_i32_1 = arith.constant 0 : i32
    return %arg1, %c0_i32, %c0_i32_0 : i32, i32, i32
  }
  func.func @transform_4(%arg0: i32, %arg1: i32) -> (i32, i32, i32) {
    %c0_i32 = arith.constant 0 : i32
    %c0_i32_0 = arith.constant 0 : i32
    %c0_i32_1 = arith.constant 0 : i32
    return %arg1, %c0_i32, %c0_i32_0 : i32, i32, i32
  }
  func.func @transform_5(%arg0: i32, %arg1: i32) -> (i32, i32, i32) {
    %c0_i32 = arith.constant 0 : i32
    %c0_i32_0 = arith.constant 0 : i32
    %c0_i32_1 = arith.constant 0 : i32
    return %arg1, %c0_i32, %c0_i32_0 : i32, i32, i32
  }
  func.func @transform_6(%arg0: i32, %arg1: i32) -> (i32, i32, i32) {
    %c0_i32 = arith.constant 0 : i32
    %c0_i32_0 = arith.constant 0 : i32
    %c0_i32_1 = arith.constant 0 : i32
    return %arg1, %c0_i32, %c0_i32_0 : i32, i32, i32
  }
  func.func @transform_7(%arg0: i32, %arg1: i32) -> (i32, i32, i32) {
    %c0_i32 = arith.constant 0 : i32
    %c0_i32_0 = arith.constant 0 : i32
    %c0_i32_1 = arith.constant 0 : i32
    return %arg1, %c0_i32, %c0_i32_0 : i32, i32, i32
  }
  func.func @transform_8(%arg0: i32, %arg1: i32) -> (i32, i32, i32) {
    %c0_i32 = arith.constant 0 : i32
    %c0_i32_0 = arith.constant 0 : i32
    %c0_i32_1 = arith.constant 0 : i32
    return %arg1, %c0_i32, %c0_i32_0 : i32, i32, i32
  }
  func.func @transform_9(%arg0: i32, %arg1: i32) -> (i32, i32, i32) {
    %c0_i32 = arith.constant 0 : i32
    %c0_i32_0 = arith.constant 0 : i32
    %c0_i32_1 = arith.constant 0 : i32
    return %arg1, %c0_i32, %c0_i32_0 : i32, i32, i32
  }
  func.func @transform_10(%arg0: i32, %arg1: i32) -> (i32, i32, i32) {
    %c0_i32 = arith.constant 0 : i32
    %c0_i32_0 = arith.constant 0 : i32
    %c0_i32_1 = arith.constant 0 : i32
    return %arg1, %c0_i32, %c0_i32_0 : i32, i32, i32
  }
  func.func @transform_11(%arg0: i32, %arg1: i32) -> (i32, i32, i32) {
    %c0_i32 = arith.constant 0 : i32
    %c0_i32_0 = arith.constant 0 : i32
    %c0_i32_1 = arith.constant 0 : i32
    return %arg1, %c0_i32, %c0_i32_0 : i32, i32, i32
  }
  func.func @transform_12(%arg0: i32, %arg1: i32) -> (i32, i32, i32) {
    %c0_i32 = arith.constant 0 : i32
    %c0_i32_0 = arith.constant 0 : i32
    %c0_i32_1 = arith.constant 0 : i32
    return %arg1, %c0_i32, %c0_i32_0 : i32, i32, i32
  }
  func.func @transform_13(%arg0: i32, %arg1: i32) -> (i32, i32, i32) {
    %c0_i32 = arith.constant 0 : i32
    %c0_i32_0 = arith.constant 0 : i32
    %c0_i32_1 = arith.constant 0 : i32
    return %arg1, %c0_i32, %c0_i32_0 : i32, i32, i32
  }
  func.func @transform_14(%arg0: i32, %arg1: i32) -> (i32, i32, i32) {
    %c0_i32 = arith.constant 0 : i32
    %c0_i32_0 = arith.constant 0 : i32
    %c0_i32_1 = arith.constant 0 : i32
    return %arg1, %c0_i32, %c0_i32_0 : i32, i32, i32
  }
  func.func @transform_15(%arg0: i32, %arg1: i32) -> (i32, i32, i32) {
    %c0_i32 = arith.constant 0 : i32
    %c0_i32_0 = arith.constant 0 : i32
    %c0_i32_1 = arith.constant 0 : i32
    return %arg1, %c0_i32, %c0_i32_0 : i32, i32, i32
  }
  func.func @transform_16(%arg0: i32, %arg1: i32) -> (i32, i32, i32) {
    %c0_i32 = arith.constant 0 : i32
    %c0_i32_0 = arith.constant 0 : i32
    %c0_i32_1 = arith.constant 0 : i32
    return %arg1, %c0_i32, %c0_i32_0 : i32, i32, i32
  }
  func.func @transform_17(%arg0: i32, %arg1: i32) -> (i32, i32, i32) {
    %c0_i32 = arith.constant 0 : i32
    %c0_i32_0 = arith.constant 0 : i32
    %c0_i32_1 = arith.constant 0 : i32
    return %arg1, %c0_i32, %c0_i32_0 : i32, i32, i32
  }
  func.func @transform_18(%arg0: i32, %arg1: i32) -> (i32, i32, i32) {
    %c0_i32 = arith.constant 0 : i32
    %c0_i32_0 = arith.constant 0 : i32
    %c0_i32_1 = arith.constant 0 : i32
    return %arg0, %c0_i32, %c0_i32_0 : i32, i32, i32
  }
}

</mosaic_0001>

<llo_original>
// kernel: tpu_custom_call.1
$region0: #{tpu_custom_call.1}
  #allocation0 [shape = 'u32[]', space=smem, size = 0x4, offset = 0x4, fixed_abs, tag = 'smem constant byte address 0x4 - core index']
  #allocation1 [shape = 'u32[72,128]{1,0:T(1,128)}', space=vmem, size = 0x9000, scoped, tag = 'internal scratch']
  #allocation2 [shape = 'f32[8,128]{1,0:T(8,128)}', space=vmem, size = 0x1000, scoped, tag = 'scratch operand']
  %s0 = inlined_call_operand.hbm [shape: f32[2,8,128], index: 0, kind: input, shape index: {}]
  %s1 = inlined_call_operand.hbm [shape: f32[2,1,8], index: 1, kind: input, shape index: {}]
  %s2 = inlined_call_operand.hbm [shape: bf16[2,128,128], index: 2, kind: input, shape index: {}]
  %s3 = inlined_call_operand.vmem [shape: f32[2,1,128], index: 3, kind: input, shape index: {}]
  %s4 = inlined_call_operand.hbm [shape: bf16[2,128,128], index: 4, kind: input, shape index: {}]
  %s5 = inlined_call_operand.hbm [shape: f32[2,1,128], index: 5, kind: input, shape index: {}]
  %s6 = inlined_call_operand.hbm [shape: bf16[2,128,128], index: 6, kind: input, shape index: {}]
  %s7 = inlined_call_operand.hbm [shape: f32[2,1,128], index: 7, kind: input, shape index: {}]
  %s8 = inlined_call_operand.hbm [shape: bf16[2,128,128], index: 8, kind: input, shape index: {}]
  %s9 = inlined_call_operand.vmem [shape: f32[2,1,128], index: 9, kind: input, shape index: {}]
  %s10 = inlined_call_operand.hbm [shape: f32[2,1,128], index: 10, kind: input, shape index: {}]
  %s11 = inlined_call_operand.vmem [shape: f32[2,1,128], index: 11, kind: input, shape index: {}]
  %s12 = inlined_call_operand.hbm [shape: bf16[2,128,256], index: 12, kind: input, shape index: {}]
  %s13 = inlined_call_operand.vmem [shape: f32[2,1,256], index: 13, kind: input, shape index: {}]
  %s14 = inlined_call_operand.hbm [shape: bf16[2,256,128], index: 14, kind: input, shape index: {}]
  %s15 = inlined_call_operand.vmem [shape: f32[2,1,128], index: 15, kind: input, shape index: {}]
  %s16 = inlined_call_operand.vmem [shape: f32[2,1,128], index: 16, kind: input, shape index: {}]
  %s17 = inlined_call_operand.vmem [shape: f32[2,1,128], index: 17, kind: input, shape index: {}]
  %s18 = inlined_call_operand.hbm [shape: f32[2,8,128], index: 18, kind: output, shape index: {}]
  %s19 = sld [smem:[#allocation0]]
  $region153: #{tpu_custom_call.1} parent=0
    _
  %s21 = ssub.s32 1, %s19
  %s22 = scalar_select 0, %s21, %s19
  $region1: #{tpu_custom_call.1} parent=0
    #allocation3 [shape = 'u8[8192]{0}', space=vmem, size = 0x2000, scoped, tag = 'input window, operand 0']
    #allocation4 [shape = 's32[2]{0}', space=sflag, size = 0x8, scoped, tag = 'scoped memory for tpu_custom_call.1']
    #allocation5 [shape = 's32[2]{0}', space=sflag, size = 0x8, scoped, tag = 'scoped memory for tpu_custom_call.1']
    #allocation6 [shape = 'u8[1024]{0}', space=vmem, size = 0x400, scoped, tag = 'input window, operand 1']
    #allocation7 [shape = 's32[2]{0}', space=sflag, size = 0x8, scoped, tag = 'scoped memory for tpu_custom_call.1']
    #allocation8 [shape = 'u8[65536]{0}', space=vmem, size = 0x10000, scoped, tag = 'input window, operand 2']
    #allocation9 [shape = 'u8[65536]{0}', space=vmem, size = 0x10000, scoped, tag = 'input window, operand 4']
    #allocation10 [shape = 's32[2]{0}', space=sflag, size = 0x8, scoped, tag = 'scoped memory for tpu_custom_call.1']
    #allocation11 [shape = 'u8[1024]{0}', space=vmem, size = 0x400, scoped, tag = 'input window, operand 5']
    #allocation12 [shape = 'u8[65536]{0}', space=vmem, size = 0x10000, scoped, tag = 'input window, operand 6']
    #allocation13 [shape = 's32[2]{0}', space=sflag, size = 0x8, scoped, tag = 'scoped memory for tpu_custom_call.1']
    #allocation14 [shape = 'u8[1024]{0}', space=vmem, size = 0x400, scoped, tag = 'input window, operand 7']
    #allocation15 [shape = 'u8[65536]{0}', space=vmem, size = 0x10000, scoped, tag = 'input window, operand 8']
    #allocation16 [shape = 's32[2]{0}', space=sflag, size = 0x8, scoped, tag = 'scoped memory for tpu_custom_call.1']
    #allocation17 [shape = 'u8[1024]{0}', space=vmem, size = 0x400, scoped, tag = 'input window, operand 10']
    #allocation18 [shape = 'u8[131072]{0}', space=vmem, size = 0x20000, scoped, tag = 'input window, operand 12']
    #allocation19 [shape = 's32[2]{0}', space=sflag, size = 0x8, scoped, tag = 'scoped memory for tpu_custom_call.1']
    #allocation20 [shape = 'u8[131072]{0}', space=vmem, size = 0x20000, scoped, tag = 'input window, operand 14']
    #allocation21 [shape = 'u8[8192]{0}', space=vmem, size = 0x2000, scoped, tag = 'output window, operand 0']
    %23 = vsyncpa [#allocation4], 0
    %s24 = scalar_lea.sflag [#allocation4], 1
    %25 = vsyncpa %s24, 0
    %26 = vsyncpa [#allocation7], 0
    %s27 = scalar_lea.sflag [#allocation7], 1
    %28 = vsyncpa %s27, 0
    %29 = vsyncpa [#allocation10], 0
    %s30 = scalar_lea.sflag [#allocation10], 1
    %31 = vsyncpa %s30, 0
    %32 = vsyncpa [#allocation13], 0
    %s33 = scalar_lea.sflag [#allocation13], 1
    %34 = vsyncpa %s33, 0
    %35 = vsyncpa [#allocation16], 0
    %s36 = scalar_lea.sflag [#allocation16], 1
    %37 = vsyncpa %s36, 0
    %38 = vsyncpa [#allocation19], 0
    %s39 = scalar_lea.sflag [#allocation19], 1
    %40 = vsyncpa %s39, 0
    %41 = vsyncpa [#allocation5], 0
    %s42 = scalar_lea.sflag [#allocation5], 1
    %43 = vsyncpa %s42, 0
    loop: start=0, step=1, limit=6
    $region2: #{tpu_custom_call.1} parent=1 // loop_pre_header
      _
    $region3: #{tpu_custom_call.1} parent=1 // loop_header
      %s45 = sphi 0, %s49
      %p46 = scmp.ge.s32.totalorder %s45, 6
      %s52 = sphi 0, %s64
      %s53 = sphi 0, %s60
      %s54 = sphi 0, %s52
      %s55 = sphi 0, %s53
      %s56 = sphi 0, %s54
      %s57 = sphi 0, %s55
      %s67 = sphi 0, %s69
      %s70 = sphi 0, %s67
      %s71 = sphi 0, %s70
      %s87 = sphi 0, %s71
      %s93 = sphi 0, %s95
      %s96 = sphi 0, %s93
      %s97 = sphi 0, %s96
      %s113 = sphi 0, %s97
      %s119 = sphi 0, %s121
      %s122 = sphi 0, %s119
      %s123 = sphi 0, %s122
      %s139 = sphi 0, %s123
      %s145 = sphi 0, %s147
      %s148 = sphi 0, %s145
      %s149 = sphi 0, %s148
      %s165 = sphi 0, %s149
      %s171 = sphi 0, %s173
      %s174 = sphi 0, %s171
      %s175 = sphi 0, %s174
      %s191 = sphi 0, %s175
      %s197 = sphi 0, %s199
      %s200 = sphi 0, %s197
      %s201 = sphi 0, %s200
      %s217 = sphi 0, %s201
      %s223 = sphi 0, %s225
      %s226 = sphi 0, %s223
      %s227 = sphi 0, %s226
      %s243 = sphi 0, %s227
      %s249 = sphi 0, %s251
      %s252 = sphi 0, %s249
      %s253 = sphi 0, %s252
      %s269 = sphi 0, %s253
      %s275 = sphi 0, %s277
      %s278 = sphi 0, %s275
      %s279 = sphi 0, %s278
      %s295 = sphi 0, %s279
      %s301 = sphi 0, %s303
      %s304 = sphi 0, %s301
      %s305 = sphi 0, %s304
      %s321 = sphi 0, %s305
      %s327 = sphi 0, %s329
      %s330 = sphi 0, %s327
      %s331 = sphi 0, %s330
      %s347 = sphi 0, %s331
      %s353 = sphi 0, %s355
      %s356 = sphi 0, %s353
      %s357 = sphi 0, %s356
      %s373 = sphi 0, %s357
      %s379 = sphi 0, %s381
      %s382 = sphi 0, %s379
      %s383 = sphi 0, %s382
      %s399 = sphi 0, %s383
      %s405 = sphi 0, %s407
      %s408 = sphi 0, %s405
      %s409 = sphi 0, %s408
      %s425 = sphi 0, %s409
      %s431 = sphi 0, %s433
      %s434 = sphi 0, %s431
      %s435 = sphi 0, %s434
      %s451 = sphi 0, %s435
      %s457 = sphi 0, %s459
      %s460 = sphi 0, %s457
      %s461 = sphi 0, %s460
      %s477 = sphi 0, %s461
      %s483 = sphi 0, %s485
      %s486 = sphi 0, %s483
      %s487 = sphi 0, %s486
      %s503 = sphi 0, %s487
      %s509 = sphi 0, %s511
      %s512 = sphi 0, %s509
      %s513 = sphi 0, %s512
      %s529 = sphi 0, %s513
      %s535 = sphi 0, %s537
      %s538 = sphi 0, %s535
      %s539 = sphi 0, %s538
      %s555 = sphi 0, %s539
    $region4: #{tpu_custom_call.1} parent=1 // loop_header_branch
      %48 = sbr.rel (%p46) target = $region8
    $region5: #{tpu_custom_call.1} parent=1 // loop_body
      %s50 = ssub.s32 %s45, 1
      %s51 = ssub.s32 %s45, 2
      %s58 = sadd.s32 1, %s53
      %p59 = scmp.ge.s32.totalorder %s58, 2
      %s60 = scalar_select %p59, 0, %s58
      %s61 = sadd.s32 1, %s52
      %s62 = scalar_select %p59, %s61, %s52
      %p63 = scmp.ge.s32.totalorder %s62, 2
      %s64 = scalar_select %p63, 0, %s62
      %s65 = ssub.s32 %s52, %s64
      %p66 = scmp.eq.s32.totalorder %s65, 0
      %s68 = sadd.s32 %s67, 1
      %s69 = scalar_select %p66, %s67, %s68
      %p72 = pneg %p66
      %p73 = scmp.eq.s32.totalorder %s45, 3
      %p74 = por %p72, %p73
      %p75 = scmp.ne.s32.totalorder %s67, %s70
      %p76 = scmp.eq.s32.totalorder %s45, 0
      %p77 = por %p75, %p76
      %p78 = scmp.ne.s32.totalorder %s67, %s70
      %p79 = scmp.eq.s32.totalorder %s50, 3
      %p80 = por %p78, %p79
      %p81 = scmp.ne.s32.totalorder %s70, %s71
      %p82 = scmp.eq.s32.totalorder %s50, 0
      %p83 = por %p81, %p82
      %p84 = scmp.ne.s32.totalorder %s70, %s71
      %p85 = scmp.eq.s32.totalorder %s51, 3
      %p86 = por %p84, %p85
      %p88 = scmp.ne.s32.totalorder %s71, %s87
      %p89 = scmp.eq.s32.totalorder %s51, 0
      %p90 = por %p88, %p89
      %s91 = ssub.s32 %s52, %s64
      %p92 = scmp.eq.s32.totalorder %s91, 0
      %s94 = sadd.s32 %s93, 1
      %s95 = scalar_select %p92, %s93, %s94
      %p98 = pneg %p92
      %p99 = scmp.eq.s32.totalorder %s45, 3
      %p100 = por %p98, %p99
      %p101 = scmp.ne.s32.totalorder %s93, %s96
      %p102 = scmp.eq.s32.totalorder %s45, 0
      %p103 = por %p101, %p102
      %p104 = scmp.ne.s32.totalorder %s93, %s96
      %p105 = scmp.eq.s32.totalorder %s50, 3
      %p106 = por %p104, %p105
      %p107 = scmp.ne.s32.totalorder %s96, %s97
      %p108 = scmp.eq.s32.totalorder %s50, 0
      %p109 = por %p107, %p108
      %p110 = scmp.ne.s32.totalorder %s96, %s97
      %p111 = scmp.eq.s32.totalorder %s51, 3
      %p112 = por %p110, %p111
      %p114 = scmp.ne.s32.totalorder %s97, %s113
      %p115 = scmp.eq.s32.totalorder %s51, 0
      %p116 = por %p114, %p115
      %s117 = ssub.s32 %s53, %s60
      %p118 = scmp.eq.s32.totalorder %s117, 0
      %s120 = sadd.s32 %s119, 1
      %s121 = scalar_select %p118, %s119, %s120
      %p124 = pneg %p118
      %p125 = scmp.eq.s32.totalorder %s45, 3
      %p126 = por %p124, %p125
      %p127 = scmp.ne.s32.totalorder %s119, %s122
      %p128 = scmp.eq.s32.totalorder %s45, 0
      %p129 = por %p127, %p128
      %p130 = scmp.ne.s32.totalorder %s119, %s122
      %p131 = scmp.eq.s32.totalorder %s50, 3
      %p132 = por %p130, %p131
      %p133 = scmp.ne.s32.totalorder %s122, %s123
      %p134 = scmp.eq.s32.totalorder %s50, 0
      %p135 = por %p133, %p134
      %p136 = scmp.ne.s32.totalorder %s122, %s123
      %p137 = scmp.eq.s32.totalorder %s51, 3
      %p138 = por %p136, %p137
      %p140 = scmp.ne.s32.totalorder %s123, %s139
      %p141 = scmp.eq.s32.totalorder %s51, 0
      %p142 = por %p140, %p141
      %s143 = ssub.s32 %s53, %s60
      %p144 = scmp.eq.s32.totalorder %s143, 0
      %s146 = sadd.s32 %s145, 1
      %s147 = scalar_select %p144, %s145, %s146
      %p150 = pneg %p144
      %p151 = scmp.eq.s32.totalorder %s45, 3
      %p152 = por %p150, %p151
      %p153 = scmp.ne.s32.totalorder %s145, %s148
      %p154 = scmp.eq.s32.totalorder %s45, 0
      %p155 = por %p153, %p154
      %p156 = scmp.ne.s32.totalorder %s145, %s148
      %p157 = scmp.eq.s32.totalorder %s50, 3
      %p158 = por %p156, %p157
      %p159 = scmp.ne.s32.totalorder %s148, %s149
      %p160 = scmp.eq.s32.totalorder %s50, 0
      %p161 = por %p159, %p160
      %p162 = scmp.ne.s32.totalorder %s148, %s149
      %p163 = scmp.eq.s32.totalorder %s51, 3
      %p164 = por %p162, %p163
      %p166 = scmp.ne.s32.totalorder %s149, %s165
      %p167 = scmp.eq.s32.totalorder %s51, 0
      %p168 = por %p166, %p167
      %s169 = ssub.s32 %s53, %s60
      %p170 = scmp.eq.s32.totalorder %s169, 0
      %s172 = sadd.s32 %s171, 1
      %s173 = scalar_select %p170, %s171, %s172
      %p176 = pneg %p170
      %p177 = scmp.eq.s32.totalorder %s45, 3
      %p178 = por %p176, %p177
      %p179 = scmp.ne.s32.totalorder %s171, %s174
      %p180 = scmp.eq.s32.totalorder %s45, 0
      %p181 = por %p179, %p180
      %p182 = scmp.ne.s32.totalorder %s171, %s174
      %p183 = scmp.eq.s32.totalorder %s50, 3
      %p184 = por %p182, %p183
      %p185 = scmp.ne.s32.totalorder %s174, %s175
      %p186 = scmp.eq.s32.totalorder %s50, 0
      %p187 = por %p185, %p186
      %p188 = scmp.ne.s32.totalorder %s174, %s175
      %p189 = scmp.eq.s32.totalorder %s51, 3
      %p190 = por %p188, %p189
      %p192 = scmp.ne.s32.totalorder %s175, %s191
      %p193 = scmp.eq.s32.totalorder %s51, 0
      %p194 = por %p192, %p193
      %s195 = ssub.s32 %s53, %s60
      %p196 = scmp.eq.s32.totalorder %s195, 0
      %s198 = sadd.s32 %s197, 1
      %s199 = scalar_select %p196, %s197, %s198
      %p202 = pneg %p196
      %p203 = scmp.eq.s32.totalorder %s45, 3
      %p204 = por %p202, %p203
      %p205 = scmp.ne.s32.totalorder %s197, %s200
      %p206 = scmp.eq.s32.totalorder %s45, 0
      %p207 = por %p205, %p206
      %p208 = scmp.ne.s32.totalorder %s197, %s200
      %p209 = scmp.eq.s32.totalorder %s50, 3
      %p210 = por %p208, %p209
      %p211 = scmp.ne.s32.totalorder %s200, %s201
      %p212 = scmp.eq.s32.totalorder %s50, 0
      %p213 = por %p211, %p212
      %p214 = scmp.ne.s32.totalorder %s200, %s201
      %p215 = scmp.eq.s32.totalorder %s51, 3
      %p216 = por %p214, %p215
      %p218 = scmp.ne.s32.totalorder %s201, %s217
      %p219 = scmp.eq.s32.totalorder %s51, 0
      %p220 = por %p218, %p219
      %s221 = ssub.s32 %s53, %s60
      %p222 = scmp.eq.s32.totalorder %s221, 0
      %s224 = sadd.s32 %s223, 1
      %s225 = scalar_select %p222, %s223, %s224
      %p228 = pneg %p222
      %p229 = scmp.eq.s32.totalorder %s45, 3
      %p230 = por %p228, %p229
      %p231 = scmp.ne.s32.totalorder %s223, %s226
      %p232 = scmp.eq.s32.totalorder %s45, 0
      %p233 = por %p231, %p232
      %p234 = scmp.ne.s32.totalorder %s223, %s226
      %p235 = scmp.eq.s32.totalorder %s50, 3
      %p236 = por %p234, %p235
      %p237 = scmp.ne.s32.totalorder %s226, %s227
      %p238 = scmp.eq.s32.totalorder %s50, 0
      %p239 = por %p237, %p238
      %p240 = scmp.ne.s32.totalorder %s226, %s227
      %p241 = scmp.eq.s32.totalorder %s51, 3
      %p242 = por %p240, %p241
      %p244 = scmp.ne.s32.totalorder %s227, %s243
      %p245 = scmp.eq.s32.totalorder %s51, 0
      %p246 = por %p244, %p245
      %s247 = ssub.s32 %s53, %s60
      %p248 = scmp.eq.s32.totalorder %s247, 0
      %s250 = sadd.s32 %s249, 1
      %s251 = scalar_select %p248, %s249, %s250
      %p254 = pneg %p248
      %p255 = scmp.eq.s32.totalorder %s45, 3
      %p256 = por %p254, %p255
      %p257 = scmp.ne.s32.totalorder %s249, %s252
      %p258 = scmp.eq.s32.totalorder %s45, 0
      %p259 = por %p257, %p258
      %p260 = scmp.ne.s32.totalorder %s249, %s252
      %p261 = scmp.eq.s32.totalorder %s50, 3
      %p262 = por %p260, %p261
      %p263 = scmp.ne.s32.totalorder %s252, %s253
      %p264 = scmp.eq.s32.totalorder %s50, 0
      %p265 = por %p263, %p264
      %p266 = scmp.ne.s32.totalorder %s252, %s253
      %p267 = scmp.eq.s32.totalorder %s51, 3
      %p268 = por %p266, %p267
      %p270 = scmp.ne.s32.totalorder %s253, %s269
      %p271 = scmp.eq.s32.totalorder %s51, 0
      %p272 = por %p270, %p271
      %s273 = ssub.s32 %s53, %s60
      %p274 = scmp.eq.s32.totalorder %s273, 0
      %s276 = sadd.s32 %s275, 1
      %s277 = scalar_select %p274, %s275, %s276
      %p280 = pneg %p274
      %p281 = scmp.eq.s32.totalorder %s45, 3
      %p282 = por %p280, %p281
      %p283 = scmp.ne.s32.totalorder %s275, %s278
      %p284 = scmp.eq.s32.totalorder %s45, 0
      %p285 = por %p283, %p284
      %p286 = scmp.ne.s32.totalorder %s275, %s278
      %p287 = scmp.eq.s32.totalorder %s50, 3
      %p288 = por %p286, %p287
      %p289 = scmp.ne.s32.totalorder %s278, %s279
      %p290 = scmp.eq.s32.totalorder %s50, 0
      %p291 = por %p289, %p290
      %p292 = scmp.ne.s32.totalorder %s278, %s279
      %p293 = scmp.eq.s32.totalorder %s51, 3
      %p294 = por %p292, %p293
      %p296 = scmp.ne.s32.totalorder %s279, %s295
      %p297 = scmp.eq.s32.totalorder %s51, 0
      %p298 = por %p296, %p297
      %s299 = ssub.s32 %s53, %s60
      %p300 = scmp.eq.s32.totalorder %s299, 0
      %s302 = sadd.s32 %s301, 1
      %s303 = scalar_select %p300, %s301, %s302
      %p306 = pneg %p300
      %p307 = scmp.eq.s32.totalorder %s45, 3
      %p308 = por %p306, %p307
      %p309 = scmp.ne.s32.totalorder %s301, %s304
      %p310 = scmp.eq.s32.totalorder %s45, 0
      %p311 = por %p309, %p310
      %p312 = scmp.ne.s32.totalorder %s301, %s304
      %p313 = scmp.eq.s32.totalorder %s50, 3
      %p314 = por %p312, %p313
      %p315 = scmp.ne.s32.totalorder %s304, %s305
      %p316 = scmp.eq.s32.totalorder %s50, 0
      %p317 = por %p315, %p316
      %p318 = scmp.ne.s32.totalorder %s304, %s305
      %p319 = scmp.eq.s32.totalorder %s51, 3
      %p320 = por %p318, %p319
      %p322 = scmp.ne.s32.totalorder %s305, %s321
      %p323 = scmp.eq.s32.totalorder %s51, 0
      %p324 = por %p322, %p323
      %s325 = ssub.s32 %s53, %s60
      %p326 = scmp.eq.s32.totalorder %s325, 0
      %s328 = sadd.s32 %s327, 1
      %s329 = scalar_select %p326, %s327, %s328
      %p332 = pneg %p326
      %p333 = scmp.eq.s32.totalorder %s45, 3
      %p334 = por %p332, %p333
      %p335 = scmp.ne.s32.totalorder %s327, %s330
      %p336 = scmp.eq.s32.totalorder %s45, 0
      %p337 = por %p335, %p336
      %p338 = scmp.ne.s32.totalorder %s327, %s330
      %p339 = scmp.eq.s32.totalorder %s50, 3
      %p340 = por %p338, %p339
      %p341 = scmp.ne.s32.totalorder %s330, %s331
      %p342 = scmp.eq.s32.totalorder %s50, 0
      %p343 = por %p341, %p342
      %p344 = scmp.ne.s32.totalorder %s330, %s331
      %p345 = scmp.eq.s32.totalorder %s51, 3
      %p346 = por %p344, %p345
      %p348 = scmp.ne.s32.totalorder %s331, %s347
      %p349 = scmp.eq.s32.totalorder %s51, 0
      %p350 = por %p348, %p349
      %s351 = ssub.s32 %s53, %s60
      %p352 = scmp.eq.s32.totalorder %s351, 0
      %s354 = sadd.s32 %s353, 1
      %s355 = scalar_select %p352, %s353, %s354
      %p358 = pneg %p352
      %p359 = scmp.eq.s32.totalorder %s45, 3
      %p360 = por %p358, %p359
      %p361 = scmp.ne.s32.totalorder %s353, %s356
      %p362 = scmp.eq.s32.totalorder %s45, 0
      %p363 = por %p361, %p362
      %p364 = scmp.ne.s32.totalorder %s353, %s356
      %p365 = scmp.eq.s32.totalorder %s50, 3
      %p366 = por %p364, %p365
      %p367 = scmp.ne.s32.totalorder %s356, %s357
      %p368 = scmp.eq.s32.totalorder %s50, 0
      %p369 = por %p367, %p368
      %p370 = scmp.ne.s32.totalorder %s356, %s357
      %p371 = scmp.eq.s32.totalorder %s51, 3
      %p372 = por %p370, %p371
      %p374 = scmp.ne.s32.totalorder %s357, %s373
      %p375 = scmp.eq.s32.totalorder %s51, 0
      %p376 = por %p374, %p375
      %s377 = ssub.s32 %s53, %s60
      %p378 = scmp.eq.s32.totalorder %s377, 0
      %s380 = sadd.s32 %s379, 1
      %s381 = scalar_select %p378, %s379, %s380
      %p384 = pneg %p378
      %p385 = scmp.eq.s32.totalorder %s45, 3
      %p386 = por %p384, %p385
      %p387 = scmp.ne.s32.totalorder %s379, %s382
      %p388 = scmp.eq.s32.totalorder %s45, 0
      %p389 = por %p387, %p388
      %p390 = scmp.ne.s32.totalorder %s379, %s382
      %p391 = scmp.eq.s32.totalorder %s50, 3
      %p392 = por %p390, %p391
      %p393 = scmp.ne.s32.totalorder %s382, %s383
      %p394 = scmp.eq.s32.totalorder %s50, 0
      %p395 = por %p393, %p394
      %p396 = scmp.ne.s32.totalorder %s382, %s383
      %p397 = scmp.eq.s32.totalorder %s51, 3
      %p398 = por %p396, %p397
      %p400 = scmp.ne.s32.totalorder %s383, %s399
      %p401 = scmp.eq.s32.totalorder %s51, 0
      %p402 = por %p400, %p401
      %s403 = ssub.s32 %s53, %s60
      %p404 = scmp.eq.s32.totalorder %s403, 0
      %s406 = sadd.s32 %s405, 1
      %s407 = scalar_select %p404, %s405, %s406
      %p410 = pneg %p404
      %p411 = scmp.eq.s32.totalorder %s45, 3
      %p412 = por %p410, %p411
      %p413 = scmp.ne.s32.totalorder %s405, %s408
      %p414 = scmp.eq.s32.totalorder %s45, 0
      %p415 = por %p413, %p414
      %p416 = scmp.ne.s32.totalorder %s405, %s408
      %p417 = scmp.eq.s32.totalorder %s50, 3
      %p418 = por %p416, %p417
      %p419 = scmp.ne.s32.totalorder %s408, %s409
      %p420 = scmp.eq.s32.totalorder %s50, 0
      %p421 = por %p419, %p420
      %p422 = scmp.ne.s32.totalorder %s408, %s409
      %p423 = scmp.eq.s32.totalorder %s51, 3
      %p424 = por %p422, %p423
      %p426 = scmp.ne.s32.totalorder %s409, %s425
      %p427 = scmp.eq.s32.totalorder %s51, 0
      %p428 = por %p426, %p427
      %s429 = ssub.s32 %s53, %s60
      %p430 = scmp.eq.s32.totalorder %s429, 0
      %s432 = sadd.s32 %s431, 1
      %s433 = scalar_select %p430, %s431, %s432
      %p436 = pneg %p430
      %p437 = scmp.eq.s32.totalorder %s45, 3
      %p438 = por %p436, %p437
      %p439 = scmp.ne.s32.totalorder %s431, %s434
      %p440 = scmp.eq.s32.totalorder %s45, 0
      %p441 = por %p439, %p440
      %p442 = scmp.ne.s32.totalorder %s431, %s434
      %p443 = scmp.eq.s32.totalorder %s50, 3
      %p444 = por %p442, %p443
      %p445 = scmp.ne.s32.totalorder %s434, %s435
      %p446 = scmp.eq.s32.totalorder %s50, 0
      %p447 = por %p445, %p446
      %p448 = scmp.ne.s32.totalorder %s434, %s435
      %p449 = scmp.eq.s32.totalorder %s51, 3
      %p450 = por %p448, %p449
      %p452 = scmp.ne.s32.totalorder %s435, %s451
      %p453 = scmp.eq.s32.totalorder %s51, 0
      %p454 = por %p452, %p453
      %s455 = ssub.s32 %s53, %s60
      %p456 = scmp.eq.s32.totalorder %s455, 0
      %s458 = sadd.s32 %s457, 1
      %s459 = scalar_select %p456, %s457, %s458
      %p462 = pneg %p456
      %p463 = scmp.eq.s32.totalorder %s45, 3
      %p464 = por %p462, %p463
      %p465 = scmp.ne.s32.totalorder %s457, %s460
      %p466 = scmp.eq.s32.totalorder %s45, 0
      %p467 = por %p465, %p466
      %p468 = scmp.ne.s32.totalorder %s457, %s460
      %p469 = scmp.eq.s32.totalorder %s50, 3
      %p470 = por %p468, %p469
      %p471 = scmp.ne.s32.totalorder %s460, %s461
      %p472 = scmp.eq.s32.totalorder %s50, 0
      %p473 = por %p471, %p472
      %p474 = scmp.ne.s32.totalorder %s460, %s461
      %p475 = scmp.eq.s32.totalorder %s51, 3
      %p476 = por %p474, %p475
      %p478 = scmp.ne.s32.totalorder %s461, %s477
      %p479 = scmp.eq.s32.totalorder %s51, 0
      %p480 = por %p478, %p479
      %s481 = ssub.s32 %s53, %s60
      %p482 = scmp.eq.s32.totalorder %s481, 0
      %s484 = sadd.s32 %s483, 1
      %s485 = scalar_select %p482, %s483, %s484
      %p488 = pneg %p482
      %p489 = scmp.eq.s32.totalorder %s45, 3
      %p490 = por %p488, %p489
      %p491 = scmp.ne.s32.totalorder %s483, %s486
      %p492 = scmp.eq.s32.totalorder %s45, 0
      %p493 = por %p491, %p492
      %p494 = scmp.ne.s32.totalorder %s483, %s486
      %p495 = scmp.eq.s32.totalorder %s50, 3
      %p496 = por %p494, %p495
      %p497 = scmp.ne.s32.totalorder %s486, %s487
      %p498 = scmp.eq.s32.totalorder %s50, 0
      %p499 = por %p497, %p498
      %p500 = scmp.ne.s32.totalorder %s486, %s487
      %p501 = scmp.eq.s32.totalorder %s51, 3
      %p502 = por %p500, %p501
      %p504 = scmp.ne.s32.totalorder %s487, %s503
      %p505 = scmp.eq.s32.totalorder %s51, 0
      %p506 = por %p504, %p505
      %s507 = ssub.s32 %s53, %s60
      %p508 = scmp.eq.s32.totalorder %s507, 0
      %s510 = sadd.s32 %s509, 1
      %s511 = scalar_select %p508, %s509, %s510
      %p514 = pneg %p508
      %p515 = scmp.eq.s32.totalorder %s45, 3
      %p516 = por %p514, %p515
      %p517 = scmp.ne.s32.totalorder %s509, %s512
      %p518 = scmp.eq.s32.totalorder %s45, 0
      %p519 = por %p517, %p518
      %p520 = scmp.ne.s32.totalorder %s509, %s512
      %p521 = scmp.eq.s32.totalorder %s50, 3
      %p522 = por %p520, %p521
      %p523 = scmp.ne.s32.totalorder %s512, %s513
      %p524 = scmp.eq.s32.totalorder %s50, 0
      %p525 = por %p523, %p524
      %p526 = scmp.ne.s32.totalorder %s512, %s513
      %p527 = scmp.eq.s32.totalorder %s51, 3
      %p528 = por %p526, %p527
      %p530 = scmp.ne.s32.totalorder %s513, %s529
      %p531 = scmp.eq.s32.totalorder %s51, 0
      %p532 = por %p530, %p531
      %s533 = ssub.s32 %s52, %s64
      %p534 = scmp.eq.s32.totalorder %s533, 0
      %s536 = sadd.s32 %s535, 1
      %s537 = scalar_select %p534, %s535, %s536
      %p540 = pneg %p534
      %p541 = scmp.eq.s32.totalorder %s45, 3
      %p542 = por %p540, %p541
      %p543 = scmp.ne.s32.totalorder %s535, %s538
      %p544 = scmp.eq.s32.totalorder %s45, 0
      %p545 = por %p543, %p544
      %p546 = scmp.ne.s32.totalorder %s535, %s538
      %p547 = scmp.eq.s32.totalorder %s50, 3
      %p548 = por %p546, %p547
      %p549 = scmp.ne.s32.totalorder %s538, %s539
      %p550 = scmp.eq.s32.totalorder %s50, 0
      %p551 = por %p549, %p550
      %p552 = scmp.ne.s32.totalorder %s538, %s539
      %p553 = scmp.eq.s32.totalorder %s51, 3
      %p554 = por %p552, %p553
      %p556 = scmp.ne.s32.totalorder %s539, %s555
      %p557 = scmp.eq.s32.totalorder %s51, 0
      %p558 = por %p556, %p557
      %p559 = scmp.le.s32.totalorder 1, %s45
      %p560 = scmp.lt.s32.totalorder %s45, 5
      %p561 = pnand %p559, %p560
      %p562 = pneg %p561
      // Predicated region
      $region9: #{tpu_custom_call.1} parent=5 // pred_check
        _
      $region10: #{tpu_custom_call.1} parent=5 // pred_check_branch
        %564 = sbr.rel (%p561) target = $region12
      $region11: #{tpu_custom_call.1} parent=5 // pred_region
        %s565 = ssub.s32 %s45, 1
      $region12: #{tpu_custom_call.1} parent=5 // pred_fallthru
        _
      %p566 = scmp.lt.s32.totalorder %s45, 4
      // Predicated region
      $region13: #{tpu_custom_call.1} parent=5 // pred_check
        %p567 = pneg %p566
      $region14: #{tpu_custom_call.1} parent=5 // pred_check_branch
        %569 = sbr.rel (%p567) target = $region16
      $region15: #{tpu_custom_call.1} parent=5 // pred_region
        // Predicated region
        $region17: #{tpu_custom_call.1} parent=15 // pred_check
          %p570 = pneg %p77
        $region18: #{tpu_custom_call.1} parent=15 // pred_check_branch
          %572 = sbr.rel (%p570) target = $region20
        $region19: #{tpu_custom_call.1} parent=15 // pred_region
          %s573 = sand.u32 %s67, 1
          %s574 = scalar_lea.sflag [#allocation4], %s573
          %s575 = sand.u32 %s67, 1
          %s576 = smul.addr %s575, 8
          %s577 = scalar_lea.vmem [#allocation3], %s576
          %579 = vsyncadd %s574, 0
          %s580 = smul.addr %s52, 8
          %s581 = scalar_lea.hbm %s0, %s580
          %s583 = sshll.u32 %s581, 4
          %s584 = int_to_ptr.hbm [resolvable:$true] %s583
          %s585 = sshll.u32 %s577, 4
          %s586 = int_to_ptr.vmem [resolvable:$true] %s585
          %588 = dma.hbm_to_vmem [thread:$0]  %s584, 128, %s586, %s574
        $region20: #{tpu_custom_call.1} parent=15 // pred_fallthru
          _
        // Predicated region
        $region21: #{tpu_custom_call.1} parent=15 // pred_check
          %p589 = pneg %p103
        $region22: #{tpu_custom_call.1} parent=15 // pred_check_branch
          %591 = sbr.rel (%p589) target = $region24
        $region23: #{tpu_custom_call.1} parent=15 // pred_region
          %s592 = sand.u32 %s45, 1
          %s593 = scalar_lea.sflag [#allocation7], %s592
          %s594 = sand.u32 %s93, 1
          %s595 = scalar_lea.vmem [#allocation6], %s594
          %597 = vsyncadd %s593, 0
          %s598 = scalar_lea.hbm %s1, %s52
          %s600 = sshll.u32 %s598, 4
          %s601 = int_to_ptr.hbm [resolvable:$true] %s600
          %s602 = sshll.u32 %s595, 4
          %s603 = int_to_ptr.vmem [resolvable:$true] %s602
          %605 = dma.hbm_to_vmem [thread:$0]  %s601, 16, %s603, %s593
        $region24: #{tpu_custom_call.1} parent=15 // pred_fallthru
          _
        // Predicated region
        $region25: #{tpu_custom_call.1} parent=15 // pred_check
          %p606 = pneg %p129
        $region26: #{tpu_custom_call.1} parent=15 // pred_check_branch
          %608 = sbr.rel (%p606) target = $region28
        $region27: #{tpu_custom_call.1} parent=15 // pred_region
          %s609 = sand.u32 %s45, 1
          %s610 = scalar_lea.sflag [#allocation7], %s609
          %s611 = sand.u32 %s119, 1
          %s612 = smul.addr %s611, 64
          %s613 = scalar_lea.vmem [#allocation8], %s612
          %615 = vsyncadd %s610, 0
          %s616 = smul.addr %s53, 16
          %s617 = smul.addr %s616, 4
          %s618 = scalar_lea.hbm %s2, %s617
          %s619 = sshll.u32 %s618, 4
          %s620 = int_to_ptr.hbm [resolvable:$true] %s619
          %s621 = sshll.u32 %s613, 4
          %s622 = int_to_ptr.vmem [resolvable:$true] %s621
          %627 = dma.hbm_to_vmem [thread:$0]  %s620, 1024, %s622, %s610, 64, 64, 4
        $region28: #{tpu_custom_call.1} parent=15 // pred_fallthru
          _
        // Predicated region
        $region29: #{tpu_custom_call.1} parent=15 // pred_check
          %p628 = pneg %p155
        $region30: #{tpu_custom_call.1} parent=15 // pred_check_branch
          %630 = sbr.rel (%p628) target = $region32
        $region31: #{tpu_custom_call.1} parent=15 // pred_region
          %p631 = scmp.lt.s32.totalorder %s53, 1
          %s632 = scalar_select %p631, %s53, 1
          %s633 = scalar_lea.vmem %s3, %s632
        $region32: #{tpu_custom_call.1} parent=15 // pred_fallthru
          _
        // Predicated region
        $region33: #{tpu_custom_call.1} parent=15 // pred_check
          %p634 = pneg %p181
        $region34: #{tpu_custom_call.1} parent=15 // pred_check_branch
          %636 = sbr.rel (%p634) target = $region36
        $region35: #{tpu_custom_call.1} parent=15 // pred_region
          %s637 = sand.u32 %s45, 1
          %s638 = scalar_lea.sflag [#allocation10], %s637
          %s639 = sand.u32 %s171, 1
          %s640 = smul.addr %s639, 64
          %s641 = scalar_lea.vmem [#allocation9], %s640
          %643 = vsyncadd %s638, 0
          %s644 = smul.addr %s53, 16
          %s645 = smul.addr %s644, 4
          %s646 = scalar_lea.hbm %s4, %s645
          %s647 = sshll.u32 %s646, 4
          %s648 = int_to_ptr.hbm [resolvable:$true] %s647
          %s649 = sshll.u32 %s641, 4
          %s650 = int_to_ptr.vmem [resolvable:$true] %s649
          %655 = dma.hbm_to_vmem [thread:$0]  %s648, 1024, %s650, %s638, 64, 64, 4
        $region36: #{tpu_custom_call.1} parent=15 // pred_fallthru
          _
        // Predicated region
        $region37: #{tpu_custom_call.1} parent=15 // pred_check
          %p656 = pneg %p207
        $region38: #{tpu_custom_call.1} parent=15 // pred_check_branch
          %658 = sbr.rel (%p656) target = $region40
        $region39: #{tpu_custom_call.1} parent=15 // pred_region
          %s659 = sand.u32 %s45, 1
          %s660 = scalar_lea.sflag [#allocation10], %s659
          %s661 = sand.u32 %s197, 1
          %s662 = scalar_lea.vmem [#allocation11], %s661
          %664 = vsyncadd %s660, 0
          %s665 = scalar_lea.hbm %s5, %s53
          %s667 = sshll.u32 %s665, 4
          %s668 = int_to_ptr.hbm [resolvable:$true] %s667
          %s669 = sshll.u32 %s662, 4
          %s670 = int_to_ptr.vmem [resolvable:$true] %s669
          %672 = dma.hbm_to_vmem [thread:$0]  %s668, 16, %s670, %s660
        $region40: #{tpu_custom_call.1} parent=15 // pred_fallthru
          _
        // Predicated region
        $region41: #{tpu_custom_call.1} parent=15 // pred_check
          %p673 = pneg %p233
        $region42: #{tpu_custom_call.1} parent=15 // pred_check_branch
          %675 = sbr.rel (%p673) target = $region44
        $region43: #{tpu_custom_call.1} parent=15 // pred_region
          %s676 = sand.u32 %s45, 1
          %s677 = scalar_lea.sflag [#allocation13], %s676
          %s678 = sand.u32 %s223, 1
          %s679 = smul.addr %s678, 64
          %s680 = scalar_lea.vmem [#allocation12], %s679
          %682 = vsyncadd %s677, 0
          %s683 = smul.addr %s53, 16
          %s684 = smul.addr %s683, 4
          %s685 = scalar_lea.hbm %s6, %s684
          %s686 = sshll.u32 %s685, 4
          %s687 = int_to_ptr.hbm [resolvable:$true] %s686
          %s688 = sshll.u32 %s680, 4
          %s689 = int_to_ptr.vmem [resolvable:$true] %s688
          %694 = dma.hbm_to_vmem [thread:$0]  %s687, 1024, %s689, %s677, 64, 64, 4
        $region44: #{tpu_custom_call.1} parent=15 // pred_fallthru
          _
        // Predicated region
        $region45: #{tpu_custom_call.1} parent=15 // pred_check
          %p695 = pneg %p259
        $region46: #{tpu_custom_call.1} parent=15 // pred_check_branch
          %697 = sbr.rel (%p695) target = $region48
        $region47: #{tpu_custom_call.1} parent=15 // pred_region
          %s698 = sand.u32 %s45, 1
          %s699 = scalar_lea.sflag [#allocation13], %s698
          %s700 = sand.u32 %s249, 1
          %s701 = scalar_lea.vmem [#allocation14], %s700
          %703 = vsyncadd %s699, 0
          %s704 = scalar_lea.hbm %s7, %s53
          %s706 = sshll.u32 %s704, 4
          %s707 = int_to_ptr.hbm [resolvable:$true] %s706
          %s708 = sshll.u32 %s701, 4
          %s709 = int_to_ptr.vmem [resolvable:$true] %s708
          %711 = dma.hbm_to_vmem [thread:$0]  %s707, 16, %s709, %s699
        $region48: #{tpu_custom_call.1} parent=15 // pred_fallthru
          _
        // Predicated region
        $region49: #{tpu_custom_call.1} parent=15 // pred_check
          %p712 = pneg %p285
        $region50: #{tpu_custom_call.1} parent=15 // pred_check_branch
          %714 = sbr.rel (%p712) target = $region52
        $region51: #{tpu_custom_call.1} parent=15 // pred_region
          %s715 = sand.u32 %s45, 1
          %s716 = scalar_lea.sflag [#allocation16], %s715
          %s717 = sand.u32 %s275, 1
          %s718 = smul.addr %s717, 64
          %s719 = scalar_lea.vmem [#allocation15], %s718
          %721 = vsyncadd %s716, 0
          %s722 = smul.addr %s53, 16
          %s723 = smul.addr %s722, 4
          %s724 = scalar_lea.hbm %s8, %s723
          %s725 = sshll.u32 %s724, 4
          %s726 = int_to_ptr.hbm [resolvable:$true] %s725
          %s727 = sshll.u32 %s719, 4
          %s728 = int_to_ptr.vmem [resolvable:$true] %s727
          %733 = dma.hbm_to_vmem [thread:$0]  %s726, 1024, %s728, %s716, 64, 64, 4
        $region52: #{tpu_custom_call.1} parent=15 // pred_fallthru
          _
        // Predicated region
        $region53: #{tpu_custom_call.1} parent=15 // pred_check
          %p734 = pneg %p311
        $region54: #{tpu_custom_call.1} parent=15 // pred_check_branch
          %736 = sbr.rel (%p734) target = $region56
        $region55: #{tpu_custom_call.1} parent=15 // pred_region
          %p737 = scmp.lt.s32.totalorder %s53, 1
          %s738 = scalar_select %p737, %s53, 1
          %s739 = scalar_lea.vmem %s9, %s738
        $region56: #{tpu_custom_call.1} parent=15 // pred_fallthru
          _
        // Predicated region
        $region57: #{tpu_custom_call.1} parent=15 // pred_check
          %p740 = pneg %p337
        $region58: #{tpu_custom_call.1} parent=15 // pred_check_branch
          %742 = sbr.rel (%p740) target = $region60
        $region59: #{tpu_custom_call.1} parent=15 // pred_region
          %s743 = sand.u32 %s45, 1
          %s744 = scalar_lea.sflag [#allocation16], %s743
          %s745 = sand.u32 %s327, 1
          %s746 = scalar_lea.vmem [#allocation17], %s745
          %748 = vsyncadd %s744, 0
          %s749 = scalar_lea.hbm %s10, %s53
          %s751 = sshll.u32 %s749, 4
          %s752 = int_to_ptr.hbm [resolvable:$true] %s751
          %s753 = sshll.u32 %s746, 4
          %s754 = int_to_ptr.vmem [resolvable:$true] %s753
          %756 = dma.hbm_to_vmem [thread:$0]  %s752, 16, %s754, %s744
        $region60: #{tpu_custom_call.1} parent=15 // pred_fallthru
          _
        // Predicated region
        $region61: #{tpu_custom_call.1} parent=15 // pred_check
          %p757 = pneg %p363
        $region62: #{tpu_custom_call.1} parent=15 // pred_check_branch
          %759 = sbr.rel (%p757) target = $region64
        $region63: #{tpu_custom_call.1} parent=15 // pred_region
          %p760 = scmp.lt.s32.totalorder %s53, 1
          %s761 = scalar_select %p760, %s53, 1
          %s762 = scalar_lea.vmem %s11, %s761
        $region64: #{tpu_custom_call.1} parent=15 // pred_fallthru
          _
        // Predicated region
        $region65: #{tpu_custom_call.1} parent=15 // pred_check
          %p763 = pneg %p389
        $region66: #{tpu_custom_call.1} parent=15 // pred_check_branch
          %765 = sbr.rel (%p763) target = $region68
        $region67: #{tpu_custom_call.1} parent=15 // pred_region
          %s766 = sand.u32 %s45, 1
          %s767 = scalar_lea.sflag [#allocation19], %s766
          %s768 = sand.u32 %s379, 1
          %s769 = smul.addr %s768, 128
          %s770 = scalar_lea.vmem [#allocation18], %s769
          %772 = vsyncadd %s767, 0
          %s773 = smul.addr %s53, 32
          %s774 = smul.addr %s773, 4
          %s775 = scalar_lea.hbm %s12, %s774
          %s776 = sshll.u32 %s775, 4
          %s777 = int_to_ptr.hbm [resolvable:$true] %s776
          %s778 = sshll.u32 %s770, 4
          %s779 = int_to_ptr.vmem [resolvable:$true] %s778
          %784 = dma.hbm_to_vmem [thread:$0]  %s777, 2048, %s779, %s767, 128, 128, 8
        $region68: #{tpu_custom_call.1} parent=15 // pred_fallthru
          _
        // Predicated region
        $region69: #{tpu_custom_call.1} parent=15 // pred_check
          %p785 = pneg %p415
        $region70: #{tpu_custom_call.1} parent=15 // pred_check_branch
          %787 = sbr.rel (%p785) target = $region72
        $region71: #{tpu_custom_call.1} parent=15 // pred_region
          %p788 = scmp.lt.s32.totalorder %s53, 1
          %s789 = scalar_select %p788, %s53, 1
          %s790 = smul.addr %s789, 2
          %s791 = scalar_lea.vmem %s13, %s790
        $region72: #{tpu_custom_call.1} parent=15 // pred_fallthru
          _
        // Predicated region
        $region73: #{tpu_custom_call.1} parent=15 // pred_check
          %p792 = pneg %p441
        $region74: #{tpu_custom_call.1} parent=15 // pred_check_branch
          %794 = sbr.rel (%p792) target = $region76
        $region75: #{tpu_custom_call.1} parent=15 // pred_region
          %s795 = sand.u32 %s45, 1
          %s796 = scalar_lea.sflag [#allocation19], %s795
          %s797 = sand.u32 %s431, 1
          %s798 = smul.addr %s797, 128
          %s799 = scalar_lea.vmem [#allocation20], %s798
          %801 = vsyncadd %s796, 0
          %s802 = smul.addr %s53, 32
          %s803 = smul.addr %s802, 4
          %s804 = scalar_lea.hbm %s14, %s803
          %s805 = sshll.u32 %s804, 4
          %s806 = int_to_ptr.hbm [resolvable:$true] %s805
          %s807 = sshll.u32 %s799, 4
          %s808 = int_to_ptr.vmem [resolvable:$true] %s807
          %813 = dma.hbm_to_vmem [thread:$0]  %s806, 2048, %s808, %s796, 64, 64, 4
        $region76: #{tpu_custom_call.1} parent=15 // pred_fallthru
          _
        // Predicated region
        $region77: #{tpu_custom_call.1} parent=15 // pred_check
          %p814 = pneg %p467
        $region78: #{tpu_custom_call.1} parent=15 // pred_check_branch
          %816 = sbr.rel (%p814) target = $region80
        $region79: #{tpu_custom_call.1} parent=15 // pred_region
          %p817 = scmp.lt.s32.totalorder %s53, 1
          %s818 = scalar_select %p817, %s53, 1
          %s819 = scalar_lea.vmem %s15, %s818
        $region80: #{tpu_custom_call.1} parent=15 // pred_fallthru
          _
        // Predicated region
        $region81: #{tpu_custom_call.1} parent=15 // pred_check
          %p820 = pneg %p493
        $region82: #{tpu_custom_call.1} parent=15 // pred_check_branch
          %822 = sbr.rel (%p820) target = $region84
        $region83: #{tpu_custom_call.1} parent=15 // pred_region
          %p823 = scmp.lt.s32.totalorder %s53, 1
          %s824 = scalar_select %p823, %s53, 1
          %s825 = scalar_lea.vmem %s16, %s824
        $region84: #{tpu_custom_call.1} parent=15 // pred_fallthru
          _
        // Predicated region
        $region85: #{tpu_custom_call.1} parent=15 // pred_check
          %p826 = pneg %p519
        $region86: #{tpu_custom_call.1} parent=15 // pred_check_branch
          %828 = sbr.rel (%p826) target = $region88
        $region87: #{tpu_custom_call.1} parent=15 // pred_region
          %p829 = scmp.lt.s32.totalorder %s53, 1
          %s830 = scalar_select %p829, %s53, 1
          %s831 = scalar_lea.vmem %s17, %s830
        $region88: #{tpu_custom_call.1} parent=15 // pred_fallthru
          _
      $region16: #{tpu_custom_call.1} parent=5 // pred_fallthru
        _
      %p832 = scmp.le.s32.totalorder 1, %s45
      %p833 = scmp.lt.s32.totalorder %s45, 5
      %p834 = pnand %p832, %p833
      %p835 = pneg %p834
      // Predicated region
      $region89: #{tpu_custom_call.1} parent=5 // pred_check
        _
      $region90: #{tpu_custom_call.1} parent=5 // pred_check_branch
        %837 = sbr.rel (%p834) target = $region92
      $region91: #{tpu_custom_call.1} parent=5 // pred_region
        %s838 = ssub.s32 %s45, 1
        %s839 = sand.u32 %s70, 1
        %s840 = scalar_lea.sflag [#allocation4], %s839
        %s841 = sand.u32 %s70, 1
        %s842 = smul.addr %s841, 8
        %s843 = scalar_lea.vmem [#allocation3], %s842
        // Predicated region
        $region93: #{tpu_custom_call.1} parent=91 // pred_check
          %p844 = pneg %p83
        $region94: #{tpu_custom_call.1} parent=91 // pred_check_branch
          %846 = sbr.rel (%p844) target = $region96
        $region95: #{tpu_custom_call.1} parent=91 // pred_region
          %848 = dma.done %s840, 128
        $region96: #{tpu_custom_call.1} parent=91 // pred_fallthru
          _
        %s849 = sand.u32 %s50, 1
        %s850 = scalar_lea.sflag [#allocation7], %s849
        %s851 = sand.u32 %s96, 1
        %s852 = scalar_lea.vmem [#allocation6], %s851
        // Predicated region
        $region97: #{tpu_custom_call.1} parent=91 // pred_check
          %p853 = pneg %p109
        $region98: #{tpu_custom_call.1} parent=91 // pred_check_branch
          %855 = sbr.rel (%p853) target = $region100
        $region99: #{tpu_custom_call.1} parent=91 // pred_region
          %857 = dma.done %s850, 16
        $region100: #{tpu_custom_call.1} parent=91 // pred_fallthru
          _
        %s858 = sand.u32 %s50, 1
        %s859 = scalar_lea.sflag [#allocation7], %s858
        %s860 = sand.u32 %s122, 1
        %s861 = smul.addr %s860, 64
        %s862 = scalar_lea.vmem [#allocation8], %s861
        // Predicated region
        $region101: #{tpu_custom_call.1} parent=91 // pred_check
          %p863 = pneg %p135
        $region102: #{tpu_custom_call.1} parent=91 // pred_check_branch
          %865 = sbr.rel (%p863) target = $region104
        $region103: #{tpu_custom_call.1} parent=91 // pred_region
          %867 = dma.done %s859, 1024
        $region104: #{tpu_custom_call.1} parent=91 // pred_fallthru
          _
        %s868 = sand.u32 %s50, 1
        %s869 = scalar_lea.sflag [#allocation10], %s868
        %s870 = sand.u32 %s174, 1
        %s871 = smul.addr %s870, 64
        %s872 = scalar_lea.vmem [#allocation9], %s871
        // Predicated region
        $region105: #{tpu_custom_call.1} parent=91 // pred_check
          %p873 = pneg %p187
        $region106: #{tpu_custom_call.1} parent=91 // pred_check_branch
          %875 = sbr.rel (%p873) target = $region108
        $region107: #{tpu_custom_call.1} parent=91 // pred_region
          %877 = dma.done %s869, 1024
        $region108: #{tpu_custom_call.1} parent=91 // pred_fallthru
          _
        %s878 = sand.u32 %s50, 1
        %s879 = scalar_lea.sflag [#allocation10], %s878
        %s880 = sand.u32 %s200, 1
        %s881 = scalar_lea.vmem [#allocation11], %s880
        // Predicated region
        $region109: #{tpu_custom_call.1} parent=91 // pred_check
          %p882 = pneg %p213
        $region110: #{tpu_custom_call.1} parent=91 // pred_check_branch
          %884 = sbr.rel (%p882) target = $region112
        $region111: #{tpu_custom_call.1} parent=91 // pred_region
          %886 = dma.done %s879, 16
        $region112: #{tpu_custom_call.1} parent=91 // pred_fallthru
          _
        %s887 = sand.u32 %s50, 1
        %s888 = scalar_lea.sflag [#allocation13], %s887
        %s889 = sand.u32 %s226, 1
        %s890 = smul.addr %s889, 64
        %s891 = scalar_lea.vmem [#allocation12], %s890
        // Predicated region
        $region113: #{tpu_custom_call.1} parent=91 // pred_check
          %p892 = pneg %p239
        $region114: #{tpu_custom_call.1} parent=91 // pred_check_branch
          %894 = sbr.rel (%p892) target = $region116
        $region115: #{tpu_custom_call.1} parent=91 // pred_region
          %896 = dma.done %s888, 1024
        $region116: #{tpu_custom_call.1} parent=91 // pred_fallthru
          _
        %s897 = sand.u32 %s50, 1
        %s898 = scalar_lea.sflag [#allocation13], %s897
        %s899 = sand.u32 %s252, 1
        %s900 = scalar_lea.vmem [#allocation14], %s899
        // Predicated region
        $region117: #{tpu_custom_call.1} parent=91 // pred_check
          %p901 = pneg %p265
        $region118: #{tpu_custom_call.1} parent=91 // pred_check_branch
          %903 = sbr.rel (%p901) target = $region120
        $region119: #{tpu_custom_call.1} parent=91 // pred_region
          %905 = dma.done %s898, 16
        $region120: #{tpu_custom_call.1} parent=91 // pred_fallthru
          _
        %s906 = sand.u32 %s50, 1
        %s907 = scalar_lea.sflag [#allocation16], %s906
        %s908 = sand.u32 %s278, 1
        %s909 = smul.addr %s908, 64
        %s910 = scalar_lea.vmem [#allocation15], %s909
        // Predicated region
        $region121: #{tpu_custom_call.1} parent=91 // pred_check
          %p911 = pneg %p291
        $region122: #{tpu_custom_call.1} parent=91 // pred_check_branch
          %913 = sbr.rel (%p911) target = $region124
        $region123: #{tpu_custom_call.1} parent=91 // pred_region
          %915 = dma.done %s907, 1024
        $region124: #{tpu_custom_call.1} parent=91 // pred_fallthru
          _
        %s916 = sand.u32 %s50, 1
        %s917 = scalar_lea.sflag [#allocation16], %s916
        %s918 = sand.u32 %s330, 1
        %s919 = scalar_lea.vmem [#allocation17], %s918
        // Predicated region
        $region125: #{tpu_custom_call.1} parent=91 // pred_check
          %p920 = pneg %p343
        $region126: #{tpu_custom_call.1} parent=91 // pred_check_branch
          %922 = sbr.rel (%p920) target = $region128
        $region127: #{tpu_custom_call.1} parent=91 // pred_region
          %924 = dma.done %s917, 16
        $region128: #{tpu_custom_call.1} parent=91 // pred_fallthru
          _
        %s925 = sand.u32 %s50, 1
        %s926 = scalar_lea.sflag [#allocation19], %s925
        %s927 = sand.u32 %s382, 1
        %s928 = smul.addr %s927, 128
        %s929 = scalar_lea.vmem [#allocation18], %s928
        // Predicated region
        $region129: #{tpu_custom_call.1} parent=91 // pred_check
          %p930 = pneg %p395
        $region130: #{tpu_custom_call.1} parent=91 // pred_check_branch
          %932 = sbr.rel (%p930) target = $region132
        $region131: #{tpu_custom_call.1} parent=91 // pred_region
          %934 = dma.done %s926, 2048
        $region132: #{tpu_custom_call.1} parent=91 // pred_fallthru
          _
        %s935 = sand.u32 %s50, 1
        %s936 = scalar_lea.sflag [#allocation19], %s935
        %s937 = sand.u32 %s434, 1
        %s938 = smul.addr %s937, 128
        %s939 = scalar_lea.vmem [#allocation20], %s938
        // Predicated region
        $region133: #{tpu_custom_call.1} parent=91 // pred_check
          %p940 = pneg %p447
        $region134: #{tpu_custom_call.1} parent=91 // pred_check_branch
          %942 = sbr.rel (%p940) target = $region136
        $region135: #{tpu_custom_call.1} parent=91 // pred_region
          %944 = dma.done %s936, 2048
        $region136: #{tpu_custom_call.1} parent=91 // pred_fallthru
          _
        %s945 = sand.u32 %s70, 1
        %s946 = scalar_lea.sflag [#allocation4], %s945
        %s947 = sand.u32 %s70, 1
        %s948 = smul.addr %s947, 8
        %s949 = scalar_lea.vmem [#allocation3], %s948
        %p950 = pneg %p83
        %p951 = pneg %p80
        %s952 = sand.u32 %s50, 1
        %s953 = scalar_lea.sflag [#allocation7], %s952
        %s954 = sand.u32 %s96, 1
        %s955 = scalar_lea.vmem [#allocation6], %s954
        %p956 = pneg %p109
        %p957 = pneg %p106
        %s958 = sand.u32 %s50, 1
        %s959 = scalar_lea.sflag [#allocation7], %s958
        %s960 = sand.u32 %s122, 1
        %s961 = smul.addr %s960, 64
        %s962 = scalar_lea.vmem [#allocation8], %s961
        %p963 = pneg %p135
        %p964 = pneg %p132
        %p965 = scmp.lt.s32.totalorder %s55, 1
        %s966 = scalar_select %p965, %s55, 1
        %s967 = scalar_lea.vmem %s3, %s966
        %p968 = pneg %p161
        %p969 = pneg %p158
        %s970 = sand.u32 %s50, 1
        %s971 = scalar_lea.sflag [#allocation10], %s970
        %s972 = sand.u32 %s174, 1
        %s973 = smul.addr %s972, 64
        %s974 = scalar_lea.vmem [#allocation9], %s973
        %p975 = pneg %p187
        %p976 = pneg %p184
        %s977 = sand.u32 %s50, 1
        %s978 = scalar_lea.sflag [#allocation10], %s977
        %s979 = sand.u32 %s200, 1
        %s980 = scalar_lea.vmem [#allocation11], %s979
        %p981 = pneg %p213
        %p982 = pneg %p210
        %s983 = sand.u32 %s50, 1
        %s984 = scalar_lea.sflag [#allocation13], %s983
        %s985 = sand.u32 %s226, 1
        %s986 = smul.addr %s985, 64
        %s987 = scalar_lea.vmem [#allocation12], %s986
        %p988 = pneg %p239
        %p989 = pneg %p236
        %s990 = sand.u32 %s50, 1
        %s991 = scalar_lea.sflag [#allocation13], %s990
        %s992 = sand.u32 %s252, 1
        %s993 = scalar_lea.vmem [#allocation14], %s992
        %p994 = pneg %p265
        %p995 = pneg %p262
        %s996 = sand.u32 %s50, 1
        %s997 = scalar_lea.sflag [#allocation16], %s996
        %s998 = sand.u32 %s278, 1
        %s999 = smul.addr %s998, 64
        %s1000 = scalar_lea.vmem [#allocation15], %s999
        %p1001 = pneg %p291
        %p1002 = pneg %p288
        %p1003 = scmp.lt.s32.totalorder %s55, 1
        %s1004 = scalar_select %p1003, %s55, 1
        %s1005 = scalar_lea.vmem %s9, %s1004
        %p1006 = pneg %p317
        %p1007 = pneg %p314
        %s1008 = sand.u32 %s50, 1
        %s1009 = scalar_lea.sflag [#allocation16], %s1008
        %s1010 = sand.u32 %s330, 1
        %s1011 = scalar_lea.vmem [#allocation17], %s1010
        %p1012 = pneg %p343
        %p1013 = pneg %p340
        %p1014 = scmp.lt.s32.totalorder %s55, 1
        %s1015 = scalar_select %p1014, %s55, 1
        %s1016 = scalar_lea.vmem %s11, %s1015
        %p1017 = pneg %p369
        %p1018 = pneg %p366
        %s1019 = sand.u32 %s50, 1
        %s1020 = scalar_lea.sflag [#allocation19], %s1019
        %s1021 = sand.u32 %s382, 1
        %s1022 = smul.addr %s1021, 128
        %s1023 = scalar_lea.vmem [#allocation18], %s1022
        %p1024 = pneg %p395
        %p1025 = pneg %p392
        %p1026 = scmp.lt.s32.totalorder %s55, 1
        %s1027 = scalar_select %p1026, %s55, 1
        %s1028 = smul.addr %s1027, 2
        %s1029 = scalar_lea.vmem %s13, %s1028
        %p1030 = pneg %p421
        %p1031 = pneg %p418
        %s1032 = sand.u32 %s50, 1
        %s1033 = scalar_lea.sflag [#allocation19], %s1032
        %s1034 = sand.u32 %s434, 1
        %s1035 = smul.addr %s1034, 128
        %s1036 = scalar_lea.vmem [#allocation20], %s1035
        %p1037 = pneg %p447
        %p1038 = pneg %p444
        %p1039 = scmp.lt.s32.totalorder %s55, 1
        %s1040 = scalar_select %p1039, %s55, 1
        %s1041 = scalar_lea.vmem %s15, %s1040
        %p1042 = pneg %p473
        %p1043 = pneg %p470
        %p1044 = scmp.lt.s32.totalorder %s55, 1
        %s1045 = scalar_select %p1044, %s55, 1
        %s1046 = scalar_lea.vmem %s16, %s1045
        %p1047 = pneg %p499
        %p1048 = pneg %p496
        %p1049 = scmp.lt.s32.totalorder %s55, 1
        %s1050 = scalar_select %p1049, %s55, 1
        %s1051 = scalar_lea.vmem %s17, %s1050
        %p1052 = pneg %p525
        %p1053 = pneg %p522
        %p1054 = pneg %p551
        %p1055 = pneg %p548
        %s1056 = sand.u32 %s538, 1
        %s1057 = scalar_lea.sflag [#allocation5], %s1056
        %s1058 = sand.u32 %s538, 1
        %s1059 = smul.addr %s1058, 8
        %s1060 = scalar_lea.vmem [#allocation21], %s1059
        %p1061 = scmp.lt.s32.totalorder %s55, 1
        %s1062 = scalar_select %p1061, %s55, 1
        %s1063 = scalar_lea.vmem %s3, %s1062
        %p1064 = scmp.lt.s32.totalorder %s55, 1
        %s1065 = scalar_select %p1064, %s55, 1
        %s1066 = scalar_lea.vmem %s9, %s1065
        %p1067 = scmp.lt.s32.totalorder %s55, 1
        %s1068 = scalar_select %p1067, %s55, 1
        %s1069 = scalar_lea.vmem %s11, %s1068
        %p1070 = scmp.lt.s32.totalorder %s55, 1
        %s1071 = scalar_select %p1070, %s55, 1
        %s1072 = smul.addr %s1071, 2
        %s1073 = scalar_lea.vmem %s13, %s1072
        %p1074 = scmp.lt.s32.totalorder %s55, 1
        %s1075 = scalar_select %p1074, %s55, 1
        %s1076 = scalar_lea.vmem %s15, %s1075
        %p1077 = scmp.lt.s32.totalorder %s55, 1
        %s1078 = scalar_select %p1077, %s55, 1
        %s1079 = scalar_lea.vmem %s16, %s1078
        %p1080 = scmp.lt.s32.totalorder %s55, 1
        %s1081 = scalar_select %p1080, %s55, 1
        %s1082 = scalar_lea.vmem %s17, %s1081
        %p1084 = scmp.eq.s32.totalorder %s55, 0
        // Predicated region
        $region137: #{tpu_custom_call.1} parent=91 // pred_check
          %p1085 = pneg %p1084
        $region138: #{tpu_custom_call.1} parent=91 // pred_check_branch
          %1087 = sbr.rel (%p1085) target = $region140
        $region139: #{tpu_custom_call.1} parent=91 // pred_region
          %v1088 = vld [vmem:[%s843] sm:$0xff]
          %1089 = vst [vmem:[%s1060] sm:$0xff] %v1088
        $region140: #{tpu_custom_call.1} parent=91 // pred_fallthru
          _
        %v1090 = vld [vmem:[%s1060] sm:$0xff]
        %v1091 = vpack.c.bf16 %v1090, %v1090
        %v1092 = vld [vmem:[%s862] sm:$0xf]
        %v1093 = vld [vmem:[%s862 + $0x4] sm:$0xf]
        %v1094 = vld [vmem:[%s862 + $0x8] sm:$0xf]
        %v1095 = vld [vmem:[%s862 + $0xc] sm:$0xf]
        %v1096 = vld [vmem:[%s862 + $0x10] sm:$0xf]
        %v1097 = vld [vmem:[%s862 + $0x14] sm:$0xf]
        %v1098 = vld [vmem:[%s862 + $0x18] sm:$0xf]
        %v1099 = vld [vmem:[%s862 + $0x1c] sm:$0xf]
        %v1100 = vld [vmem:[%s862 + $0x20] sm:$0xf]
        %v1101 = vld [vmem:[%s862 + $0x24] sm:$0xf]
        %v1102 = vld [vmem:[%s862 + $0x28] sm:$0xf]
        %v1103 = vld [vmem:[%s862 + $0x2c] sm:$0xf]
        %v1104 = vld [vmem:[%s862 + $0x30] sm:$0xf]
        %v1105 = vld [vmem:[%s862 + $0x34] sm:$0xf]
        %v1106 = vld [vmem:[%s862 + $0x38] sm:$0xf]
        %v1107 = vld [vmem:[%s862 + $0x3c] sm:$0xf]
        %v1108 = vld [vmem:[%s1063] sm:$0x1]
        %v1110 = vperm.slane %v1108, 0
        %v1128 = vunpack.c.l.b16 %v1092
        %v1129 = vunpack.c.l.b16 %v1093
        %v1130 = vunpack.c.l.b16 %v1094
        %v1131 = vunpack.c.l.b16 %v1095
        %v1132 = vunpack.c.l.b16 %v1096
        %v1133 = vunpack.c.l.b16 %v1097
        %v1134 = vunpack.c.l.b16 %v1098
        %v1135 = vunpack.c.l.b16 %v1099
        %v1136 = vunpack.c.l.b16 %v1100
        %v1137 = vunpack.c.l.b16 %v1101
        %v1138 = vunpack.c.l.b16 %v1102
        %v1139 = vunpack.c.l.b16 %v1103
        %v1140 = vunpack.c.l.b16 %v1104
        %v1141 = vunpack.c.l.b16 %v1105
        %v1142 = vunpack.c.l.b16 %v1106
        %v1143 = vunpack.c.l.b16 %v1107
        %v1144 = vpack.c.b16 %v1129, %v1128
        %v1145 = vpack.c.b16 %v1131, %v1130
        %v1146 = vpack.c.b16 %v1133, %v1132
        %v1147 = vpack.c.b16 %v1135, %v1134
        %v1148 = vpack.c.b16 %v1137, %v1136
        %v1149 = vpack.c.b16 %v1139, %v1138
        %v1150 = vpack.c.b16 %v1141, %v1140
        %v1151 = vpack.c.b16 %v1143, %v1142
        %1160 = vmatpush.bf16.msra.mxu0 %v1151
        %1161 = vmatpush.bf16.msra.mxu0 %v1150
        %1162 = vmatpush.bf16.msra.mxu0 %v1149
        %1163 = vmatpush.bf16.msra.mxu0 %v1148
        %1164 = vmatpush.bf16.msra.mxu0 %v1147
        %1165 = vmatpush.bf16.msra.mxu0 %v1146
        %1166 = vmatpush.bf16.msra.mxu0 %v1145
        %1167 = vmatpush.bf16.msra.mxu0 %v1144
        %1168 = vmatmul.bf16.gmra.mxu0 %v1091
        %v1169 = vpop.f32.mrf.mxu0
        %v1170 = vadd.f32 %v1110, %v1169
        %v1171 = vpop.f32.mrf.mxu0
        %1172 = vdwg.mxu0
        %v1173 = vmul.f32 %v1170, 0.17677669
        %v1174 = vld [vmem:[%s872] sm:$0xf]
        %v1175 = vld [vmem:[%s872 + $0x4] sm:$0xf]
        %v1176 = vld [vmem:[%s872 + $0x8] sm:$0xf]
        %v1177 = vld [vmem:[%s872 + $0xc] sm:$0xf]
        %v1178 = vld [vmem:[%s872 + $0x10] sm:$0xf]
        %v1179 = vld [vmem:[%s872 + $0x14] sm:$0xf]
        %v1180 = vld [vmem:[%s872 + $0x18] sm:$0xf]
        %v1181 = vld [vmem:[%s872 + $0x1c] sm:$0xf]
        %v1182 = vld [vmem:[%s872 + $0x20] sm:$0xf]
        %v1183 = vld [vmem:[%s872 + $0x24] sm:$0xf]
        %v1184 = vld [vmem:[%s872 + $0x28] sm:$0xf]
        %v1185 = vld [vmem:[%s872 + $0x2c] sm:$0xf]
        %v1186 = vld [vmem:[%s872 + $0x30] sm:$0xf]
        %v1187 = vld [vmem:[%s872 + $0x34] sm:$0xf]
        %v1188 = vld [vmem:[%s872 + $0x38] sm:$0xf]
        %v1189 = vld [vmem:[%s872 + $0x3c] sm:$0xf]
        %v1190 = vld [vmem:[%s881] sm:$0x1]
        %v1192 = vperm.slane %v1190, 0
        %v1210 = vunpack.c.l.b16 %v1174
        %v1211 = vunpack.c.l.b16 %v1175
        %v1212 = vunpack.c.l.b16 %v1176
        %v1213 = vunpack.c.l.b16 %v1177
        %v1214 = vunpack.c.l.b16 %v1178
        %v1215 = vunpack.c.l.b16 %v1179
        %v1216 = vunpack.c.l.b16 %v1180
        %v1217 = vunpack.c.l.b16 %v1181
        %v1218 = vunpack.c.l.b16 %v1182
        %v1219 = vunpack.c.l.b16 %v1183
        %v1220 = vunpack.c.l.b16 %v1184
        %v1221 = vunpack.c.l.b16 %v1185
        %v1222 = vunpack.c.l.b16 %v1186
        %v1223 = vunpack.c.l.b16 %v1187
        %v1224 = vunpack.c.l.b16 %v1188
        %v1225 = vunpack.c.l.b16 %v1189
        %v1226 = vpack.c.b16 %v1211, %v1210
        %v1227 = vpack.c.b16 %v1213, %v1212
        %v1228 = vpack.c.b16 %v1215, %v1214
        %v1229 = vpack.c.b16 %v1217, %v1216
        %v1230 = vpack.c.b16 %v1219, %v1218
        %v1231 = vpack.c.b16 %v1221, %v1220
        %v1232 = vpack.c.b16 %v1223, %v1222
        %v1233 = vpack.c.b16 %v1225, %v1224
        %1242 = vmatpush.bf16.msra.mxu0 %v1233
        %1243 = vmatpush.bf16.msra.mxu0 %v1232
        %1244 = vmatpush.bf16.msra.mxu0 %v1231
        %1245 = vmatpush.bf16.msra.mxu0 %v1230
        %1246 = vmatpush.bf16.msra.mxu0 %v1229
        %1247 = vmatpush.bf16.msra.mxu0 %v1228
        %1248 = vmatpush.bf16.msra.mxu0 %v1227
        %1249 = vmatpush.bf16.msra.mxu0 %v1226
        %1250 = vmatmul.bf16.gmra.mxu0 %v1091
        %v1251 = vpop.f32.mrf.mxu0
        %v1252 = vadd.f32 %v1192, %v1251
        %v1253 = vpop.f32.mrf.mxu0
        %1254 = vdwg.mxu0
        %v1255 = vld [vmem:[%s891] sm:$0xf]
        %v1256 = vld [vmem:[%s891 + $0x4] sm:$0xf]
        %v1257 = vld [vmem:[%s891 + $0x8] sm:$0xf]
        %v1258 = vld [vmem:[%s891 + $0xc] sm:$0xf]
        %v1259 = vld [vmem:[%s891 + $0x10] sm:$0xf]
        %v1260 = vld [vmem:[%s891 + $0x14] sm:$0xf]
        %v1261 = vld [vmem:[%s891 + $0x18] sm:$0xf]
        %v1262 = vld [vmem:[%s891 + $0x1c] sm:$0xf]
        %v1263 = vld [vmem:[%s891 + $0x20] sm:$0xf]
        %v1264 = vld [vmem:[%s891 + $0x24] sm:$0xf]
        %v1265 = vld [vmem:[%s891 + $0x28] sm:$0xf]
        %v1266 = vld [vmem:[%s891 + $0x2c] sm:$0xf]
        %v1267 = vld [vmem:[%s891 + $0x30] sm:$0xf]
        %v1268 = vld [vmem:[%s891 + $0x34] sm:$0xf]
        %v1269 = vld [vmem:[%s891 + $0x38] sm:$0xf]
        %v1270 = vld [vmem:[%s891 + $0x3c] sm:$0xf]
        %v1271 = vld [vmem:[%s900] sm:$0x1]
        %v1273 = vperm.slane %v1271, 0
        %v1291 = vunpack.c.l.b16 %v1255
        %v1292 = vunpack.c.l.b16 %v1256
        %v1293 = vunpack.c.l.b16 %v1257
        %v1294 = vunpack.c.l.b16 %v1258
        %v1295 = vunpack.c.l.b16 %v1259
        %v1296 = vunpack.c.l.b16 %v1260
        %v1297 = vunpack.c.l.b16 %v1261
        %v1298 = vunpack.c.l.b16 %v1262
        %v1299 = vunpack.c.l.b16 %v1263
        %v1300 = vunpack.c.l.b16 %v1264
        %v1301 = vunpack.c.l.b16 %v1265
        %v1302 = vunpack.c.l.b16 %v1266
        %v1303 = vunpack.c.l.b16 %v1267
        %v1304 = vunpack.c.l.b16 %v1268
        %v1305 = vunpack.c.l.b16 %v1269
        %v1306 = vunpack.c.l.b16 %v1270
        %v1307 = vpack.c.b16 %v1292, %v1291
        %v1308 = vpack.c.b16 %v1294, %v1293
        %v1309 = vpack.c.b16 %v1296, %v1295
        %v1310 = vpack.c.b16 %v1298, %v1297
        %v1311 = vpack.c.b16 %v1300, %v1299
        %v1312 = vpack.c.b16 %v1302, %v1301
        %v1313 = vpack.c.b16 %v1304, %v1303
        %v1314 = vpack.c.b16 %v1306, %v1305
        %1323 = vmatpush.bf16.msra.mxu0 %v1314
        %1324 = vmatpush.bf16.msra.mxu0 %v1313
        %1325 = vmatpush.bf16.msra.mxu0 %v1312
        %1326 = vmatpush.bf16.msra.mxu0 %v1311
        %1327 = vmatpush.bf16.msra.mxu0 %v1310
        %1328 = vmatpush.bf16.msra.mxu0 %v1309
        %1329 = vmatpush.bf16.msra.mxu0 %v1308
        %1330 = vmatpush.bf16.msra.mxu0 %v1307
        %1331 = vmatmul.bf16.gmra.mxu0 %v1091
        %v1332 = vpop.f32.mrf.mxu0
        %v1333 = vadd.f32 %v1273, %v1332
        %v1334 = vpop.f32.mrf.mxu0
        %1335 = vdwg.mxu0
        %v1336 = vld [vmem:[%s852] sm:$0x1]
        %v1337 = vpack.c.bf16 %v1173, %v1173
        %v1338 = vpack.c.bf16 %v1252, %v1252
        %v1339 = vpack.c.bf16 %v1333, %v1333
        %v1341 = vperm.slane %v1336, 0
        %vm1343 = vcmask 261120
        %v1345 = vsel %vm1343, %v1337, 0
        %v1348 = vsel %vm1343, %v1338, 0
        %1350 = vmatpush.bf16.xpose.msra.mxu0 0
        %1351 = vmatpush.bf16.xpose.msra.mxu0 0
        %1352 = vmatpush.bf16.xpose.msra.mxu0 0
        %1353 = vmatpush.bf16.xpose.msra.mxu0 0
        %1354 = vmatpush.bf16.xpose.msra.mxu0 0
        %1355 = vmatpush.bf16.xpose.msra.mxu0 0
        %1356 = vmatpush.bf16.xpose.msra.mxu0 0
        %1357 = vmatpush.bf16.xpose.msra.mxu0 %v1348
        %1358 = vmatmul.bf16.gmra.mxu0 %v1345
        %v1359 = vpop.f32.mrf.mxu0
        %v1360 = vadd.f32 %v1341, %v1359
        %v1361 = vpop.f32.mrf.mxu0
        %1362 = vdwg.mxu0
        %vm1363 = vcmask 64512
        %v1364 = vsel %vm1363, %v1360, -inf
        %1365 = vmax.xlane.f32.xlu0 %v1364
        %v1366 = vpop.xlane.xlu0 %1365
        %v1367 = vsub.f32 %v1360, %v1366
        %v1368 = vmul.f32 %v1367, 1.442695
        %v1369 = vpow.pop %v1368
        %v1370 = vsel %vm1363, %v1369, 0.0
        %1371 = vadd.xlane.f32.xlu0 %v1370
        %v1372 = vpop.xlane.xlu0 %1371
        %v1373 = vrcp.pop %v1372
        %v1374 = vmul.f32 %v1369, %v1373
        %v1375 = vpack.c.bf16 %v1374, %v1374
        %v1377 = vsel %vm1363, %v1375, 0
        %vm1379 = vcmask 1043456
        %v1381 = vsel %vm1379, %v1339, 0
        %1383 = vmatpush.bf16.msra.mxu0 0
        %1384 = vmatpush.bf16.msra.mxu0 0
        %1385 = vmatpush.bf16.msra.mxu0 0
        %1386 = vmatpush.bf16.msra.mxu0 0
        %1387 = vmatpush.bf16.msra.mxu0 0
        %1388 = vmatpush.bf16.msra.mxu0 0
        %1389 = vmatpush.bf16.msra.mxu0 0
        %1390 = vmatpush.bf16.msra.mxu0 %v1381
        %1391 = vmatmul.bf16.gmra.mxu0 %v1377
        %v1392 = vpop.f32.mrf.mxu0
        %v1393 = vadd.f32 0.0, %v1392
        %v1394 = vpop.f32.mrf.mxu0
        %1395 = vdwg.mxu0
        %1396 = vst.msk [vmem:[#allocation2] sm:$0xff] %vm1343, %v1393
        %1398 = vrot.lane.b32.xlu0 %v1337, 96
        %v1399 = vpop.permute.xlu0 %1398
        %1401 = vrot.lane.b32.xlu0 %v1338, 96
        %v1402 = vpop.permute.xlu0 %1401
        %v1404 = vsel %vm1343, %v1399, 0
        %v1407 = vsel %vm1343, %v1402, 0
        %1409 = vmatpush.bf16.xpose.msra.mxu0 0
        %1410 = vmatpush.bf16.xpose.msra.mxu0 0
        %1411 = vmatpush.bf16.xpose.msra.mxu0 0
        %1412 = vmatpush.bf16.xpose.msra.mxu0 0
        %1413 = vmatpush.bf16.xpose.msra.mxu0 0
        %1414 = vmatpush.bf16.xpose.msra.mxu0 0
        %1415 = vmatpush.bf16.xpose.msra.mxu0 0
        %1416 = vmatpush.bf16.xpose.msra.mxu0 %v1407
        %1417 = vmatmul.bf16.gmra.mxu0 %v1404
        %v1418 = vpop.f32.mrf.mxu0
        %v1419 = vadd.f32 %v1341, %v1418
        %v1420 = vpop.f32.mrf.mxu0
        %1421 = vdwg.mxu0
        %v1422 = vsel %vm1363, %v1419, -inf
        %1423 = vmax.xlane.f32.xlu0 %v1422
        %v1424 = vpop.xlane.xlu0 %1423
        %v1425 = vsub.f32 %v1419, %v1424
        %v1426 = vmul.f32 %v1425, 1.442695
        %v1427 = vpow.pop %v1426
        %v1428 = vsel %vm1363, %v1427, 0.0
        %1429 = vadd.xlane.f32.xlu0 %v1428
        %v1430 = vpop.xlane.xlu0 %1429
        %v1431 = vrcp.pop %v1430
        %v1432 = vmul.f32 %v1427, %v1431
        %v1433 = vpack.c.bf16 %v1432, %v1432
        %1435 = vrot.lane.b32.xlu0 %v1339, 96
        %v1436 = vpop.permute.xlu0 %1435
        %v1438 = vsel %vm1363, %v1433, 0
        %v1441 = vsel %vm1379, %v1436, 0
        %1443 = vmatpush.bf16.msra.mxu0 0
        %1444 = vmatpush.bf16.msra.mxu0 0
        %1445 = vmatpush.bf16.msra.mxu0 0
        %1446 = vmatpush.bf16.msra.mxu0 0
        %1447 = vmatpush.bf16.msra.mxu0 0
        %1448 = vmatpush.bf16.msra.mxu0 0
        %1449 = vmatpush.bf16.msra.mxu0 0
        %1450 = vmatpush.bf16.msra.mxu0 %v1441
        %1451 = vmatmul.bf16.gmra.mxu0 %v1438
        %v1452 = vpop.f32.mrf.mxu0
        %v1453 = vadd.f32 0.0, %v1452
        %v1454 = vpop.f32.mrf.mxu0
        %1455 = vdwg.mxu0
        %1457 = vrot.lane.b32.xlu0 %v1453, 32
        %v1458 = vpop.permute.xlu0 %1457
        %vm1460 = vcmask 523520
        %1461 = vst.msk [vmem:[#allocation2] sm:$0xff] %vm1460, %v1458
        %1462 = vrot.lane.b32.xlu0 %v1337, 64
        %v1463 = vpop.permute.xlu0 %1462
        %1464 = vrot.lane.b32.xlu0 %v1338, 64
        %v1465 = vpop.permute.xlu0 %1464
        %v1467 = vsel %vm1343, %v1463, 0
        %v1470 = vsel %vm1343, %v1465, 0
        %1472 = vmatpush.bf16.xpose.msra.mxu0 0
        %1473 = vmatpush.bf16.xpose.msra.mxu0 0
        %1474 = vmatpush.bf16.xpose.msra.mxu0 0
        %1475 = vmatpush.bf16.xpose.msra.mxu0 0
        %1476 = vmatpush.bf16.xpose.msra.mxu0 0
        %1477 = vmatpush.bf16.xpose.msra.mxu0 0
        %1478 = vmatpush.bf16.xpose.msra.mxu0 0
        %1479 = vmatpush.bf16.xpose.msra.mxu0 %v1470
        %1480 = vmatmul.bf16.gmra.mxu0 %v1467
        %v1481 = vpop.f32.mrf.mxu0
        %v1482 = vadd.f32 %v1341, %v1481
        %v1483 = vpop.f32.mrf.mxu0
        %1484 = vdwg.mxu0
        %v1485 = vsel %vm1363, %v1482, -inf
        %1486 = vmax.xlane.f32.xlu0 %v1485
        %v1487 = vpop.xlane.xlu0 %1486
        %v1488 = vsub.f32 %v1482, %v1487
        %v1489 = vmul.f32 %v1488, 1.442695
        %v1490 = vpow.pop %v1489
        %v1491 = vsel %vm1363, %v1490, 0.0
        %1492 = vadd.xlane.f32.xlu0 %v1491
        %v1493 = vpop.xlane.xlu0 %1492
        %v1494 = vrcp.pop %v1493
        %v1495 = vmul.f32 %v1490, %v1494
        %v1496 = vpack.c.bf16 %v1495, %v1495
        %1497 = vrot.lane.b32.xlu0 %v1339, 64
        %v1498 = vpop.permute.xlu0 %1497
        %v1500 = vsel %vm1363, %v1496, 0
        %v1503 = vsel %vm1379, %v1498, 0
        %1505 = vmatpush.bf16.msra.mxu0 0
        %1506 = vmatpush.bf16.msra.mxu0 0
        %1507 = vmatpush.bf16.msra.mxu0 0
        %1508 = vmatpush.bf16.msra.mxu0 0
        %1509 = vmatpush.bf16.msra.mxu0 0
        %1510 = vmatpush.bf16.msra.mxu0 0
        %1511 = vmatpush.bf16.msra.mxu0 0
        %1512 = vmatpush.bf16.msra.mxu0 %v1503
        %1513 = vmatmul.bf16.gmra.mxu0 %v1500
        %v1514 = vpop.f32.mrf.mxu0
        %v1515 = vadd.f32 0.0, %v1514
        %v1516 = vpop.f32.mrf.mxu0
        %1517 = vdwg.mxu0
        %1519 = vrot.lane.b32.xlu0 %v1515, 64
        %v1520 = vpop.permute.xlu0 %1519
        %vm1522 = vcmask 785920
        %1523 = vst.msk [vmem:[#allocation2] sm:$0xff] %vm1522, %v1520
        %1524 = vrot.lane.b32.xlu0 %v1337, 32
        %v1525 = vpop.permute.xlu0 %1524
        %1526 = vrot.lane.b32.xlu0 %v1338, 32
        %v1527 = vpop.permute.xlu0 %1526
        %v1529 = vsel %vm1343, %v1525, 0
        %v1532 = vsel %vm1343, %v1527, 0
        %1534 = vmatpush.bf16.xpose.msra.mxu0 0
        %1535 = vmatpush.bf16.xpose.msra.mxu0 0
        %1536 = vmatpush.bf16.xpose.msra.mxu0 0
        %1537 = vmatpush.bf16.xpose.msra.mxu0 0
        %1538 = vmatpush.bf16.xpose.msra.mxu0 0
        %1539 = vmatpush.bf16.xpose.msra.mxu0 0
        %1540 = vmatpush.bf16.xpose.msra.mxu0 0
        %1541 = vmatpush.bf16.xpose.msra.mxu0 %v1532
        %1542 = vmatmul.bf16.gmra.mxu0 %v1529
        %v1543 = vpop.f32.mrf.mxu0
        %v1544 = vadd.f32 %v1341, %v1543
        %v1545 = vpop.f32.mrf.mxu0
        %1546 = vdwg.mxu0
        %v1547 = vsel %vm1363, %v1544, -inf
        %1548 = vmax.xlane.f32.xlu0 %v1547
        %v1549 = vpop.xlane.xlu0 %1548
        %v1550 = vsub.f32 %v1544, %v1549
        %v1551 = vmul.f32 %v1550, 1.442695
        %v1552 = vpow.pop %v1551
        %v1553 = vsel %vm1363, %v1552, 0.0
        %1554 = vadd.xlane.f32.xlu0 %v1553
        %v1555 = vpop.xlane.xlu0 %1554
        %v1556 = vrcp.pop %v1555
        %v1557 = vmul.f32 %v1552, %v1556
        %v1558 = vpack.c.bf16 %v1557, %v1557
        %1559 = vrot.lane.b32.xlu0 %v1339, 32
        %v1560 = vpop.permute.xlu0 %1559
        %v1562 = vsel %vm1363, %v1558, 0
        %v1565 = vsel %vm1379, %v1560, 0
        %1567 = vmatpush.bf16.msra.mxu0 0
        %1568 = vmatpush.bf16.msra.mxu0 0
        %1569 = vmatpush.bf16.msra.mxu0 0
        %1570 = vmatpush.bf16.msra.mxu0 0
        %1571 = vmatpush.bf16.msra.mxu0 0
        %1572 = vmatpush.bf16.msra.mxu0 0
        %1573 = vmatpush.bf16.msra.mxu0 0
        %1574 = vmatpush.bf16.msra.mxu0 %v1565
        %1575 = vmatmul.bf16.gmra.mxu0 %v1562
        %v1576 = vpop.f32.mrf.mxu0
        %v1577 = vadd.f32 0.0, %v1576
        %v1578 = vpop.f32.mrf.mxu0
        %1579 = vdwg.mxu0
        %1581 = vrot.lane.b32.xlu0 %v1577, 96
        %v1582 = vpop.permute.xlu0 %1581
        %vm1584 = vcmask 1048320
        %1585 = vst.msk [vmem:[#allocation2] sm:$0xff] %vm1584, %v1582
        %v1586 = vld [vmem:[#allocation2] sm:$0xff]
        %v1587 = vpack.c.bf16 %v1586, %v1586
        %v1588 = vld [vmem:[%s910] sm:$0xf]
        %v1589 = vld [vmem:[%s910 + $0x4] sm:$0xf]
        %v1590 = vld [vmem:[%s910 + $0x8] sm:$0xf]
        %v1591 = vld [vmem:[%s910 + $0xc] sm:$0xf]
        %v1592 = vld [vmem:[%s910 + $0x10] sm:$0xf]
        %v1593 = vld [vmem:[%s910 + $0x14] sm:$0xf]
        %v1594 = vld [vmem:[%s910 + $0x18] sm:$0xf]
        %v1595 = vld [vmem:[%s910 + $0x1c] sm:$0xf]
        %v1596 = vld [vmem:[%s910 + $0x20] sm:$0xf]
        %v1597 = vld [vmem:[%s910 + $0x24] sm:$0xf]
        %v1598 = vld [vmem:[%s910 + $0x28] sm:$0xf]
        %v1599 = vld [vmem:[%s910 + $0x2c] sm:$0xf]
        %v1600 = vld [vmem:[%s910 + $0x30] sm:$0xf]
        %v1601 = vld [vmem:[%s910 + $0x34] sm:$0xf]
        %v1602 = vld [vmem:[%s910 + $0x38] sm:$0xf]
        %v1603 = vld [vmem:[%s910 + $0x3c] sm:$0xf]
        %v1604 = vld [vmem:[%s1066] sm:$0x1]
        %v1606 = vperm.slane %v1604, 0
        %v1624 = vunpack.c.l.b16 %v1588
        %v1625 = vunpack.c.l.b16 %v1589
        %v1626 = vunpack.c.l.b16 %v1590
        %v1627 = vunpack.c.l.b16 %v1591
        %v1628 = vunpack.c.l.b16 %v1592
        %v1629 = vunpack.c.l.b16 %v1593
        %v1630 = vunpack.c.l.b16 %v1594
        %v1631 = vunpack.c.l.b16 %v1595
        %v1632 = vunpack.c.l.b16 %v1596
        %v1633 = vunpack.c.l.b16 %v1597
        %v1634 = vunpack.c.l.b16 %v1598
        %v1635 = vunpack.c.l.b16 %v1599
        %v1636 = vunpack.c.l.b16 %v1600
        %v1637 = vunpack.c.l.b16 %v1601
        %v1638 = vunpack.c.l.b16 %v1602
        %v1639 = vunpack.c.l.b16 %v1603
        %v1640 = vpack.c.b16 %v1625, %v1624
        %v1641 = vpack.c.b16 %v1627, %v1626
        %v1642 = vpack.c.b16 %v1629, %v1628
        %v1643 = vpack.c.b16 %v1631, %v1630
        %v1644 = vpack.c.b16 %v1633, %v1632
        %v1645 = vpack.c.b16 %v1635, %v1634
        %v1646 = vpack.c.b16 %v1637, %v1636
        %v1647 = vpack.c.b16 %v1639, %v1638
        %1656 = vmatpush.bf16.msra.mxu0 %v1647
        %1657 = vmatpush.bf16.msra.mxu0 %v1646
        %1658 = vmatpush.bf16.msra.mxu0 %v1645
        %1659 = vmatpush.bf16.msra.mxu0 %v1644
        %1660 = vmatpush.bf16.msra.mxu0 %v1643
        %1661 = vmatpush.bf16.msra.mxu0 %v1642
        %1662 = vmatpush.bf16.msra.mxu0 %v1641
        %1663 = vmatpush.bf16.msra.mxu0 %v1640
        %1664 = vmatmul.bf16.gmra.mxu0 %v1587
        %v1665 = vpop.f32.mrf.mxu0
        %v1666 = vadd.f32 %v1606, %v1665
        %v1667 = vpop.f32.mrf.mxu0
        %1668 = vdwg.mxu0
        %v1669 = vadd.f32 %v1666, %v1090
        %1670 = vadd.xlane.f32.xlu0 %v1669
        %v1671 = vpop.xlane.xlu0 %1670
        %v1672 = vrcp.pop 128.0
        %v1673 = vmul.f32 128.0, %v1672
        %v1674 = vsub.f32 1.0, %v1673
        %v1675 = vmul.f32 %v1672, %v1674
        %v1676 = vadd.f32 %v1672, %v1675
        %vm1677 = vweird.f32 %v1672
        %v1678 = vsel %vm1677, %v1672, %v1676
        %v1679 = vmul.f32 %v1671, %v1678
        %v1680 = vsub.f32 %v1669, %v1679
        %v1681 = vmul.f32 %v1680, %v1680
        %1682 = vadd.xlane.f32.xlu0 %v1681
        %v1683 = vpop.xlane.xlu0 %1682
        %v1684 = vmul.f32 %v1683, %v1678
        %v1685 = vadd.f32 %v1684, 1e-12
        %v1686 = vrsqrt.pop %v1685
        %v1687 = vmul.f32 %v1686, %v1685
        %v1688 = vmul.f32 %v1687, %v1686
        %v1689 = vmul.f32 0.5, %v1688
        %v1690 = vsub.f32 1.5, %v1689
        %v1691 = vmul.f32 %v1686, %v1690
        %vm1692 = vweird.f32 %v1685
        %vm1693 = vweird.f32 %v1686
        %vm1694 = vmor %vm1692, %vm1693
        %v1695 = vsel %vm1694, %v1686, %v1691
        %v1696 = vmul.f32 %v1680, %v1695
        %v1697 = vld [vmem:[%s919] sm:$0x1]
        %v1699 = vperm.slane %v1697, 0
        %v1701 = vmul.f32 %v1696, %v1699
        %v1702 = vld [vmem:[%s1069] sm:$0x1]
        %v1704 = vperm.slane %v1702, 0
        %v1706 = vadd.f32 %v1701, %v1704
        %v1707 = vpack.c.bf16 %v1706, %v1706
        %v1708 = vld [vmem:[%s929] sm:$0xff]
        %v1709 = vld [vmem:[%s929 + $0x8] sm:$0xff]
        %v1710 = vld [vmem:[%s929 + $0x10] sm:$0xff]
        %v1711 = vld [vmem:[%s929 + $0x18] sm:$0xff]
        %v1712 = vld [vmem:[%s929 + $0x20] sm:$0xff]
        %v1713 = vld [vmem:[%s929 + $0x28] sm:$0xff]
        %v1714 = vld [vmem:[%s929 + $0x30] sm:$0xff]
        %v1715 = vld [vmem:[%s929 + $0x38] sm:$0xff]
        %v1716 = vld [vmem:[%s929 + $0x40] sm:$0xff]
        %v1717 = vld [vmem:[%s929 + $0x48] sm:$0xff]
        %v1718 = vld [vmem:[%s929 + $0x50] sm:$0xff]
        %v1719 = vld [vmem:[%s929 + $0x58] sm:$0xff]
        %v1720 = vld [vmem:[%s929 + $0x60] sm:$0xff]
        %v1721 = vld [vmem:[%s929 + $0x68] sm:$0xff]
        %v1722 = vld [vmem:[%s929 + $0x70] sm:$0xff]
        %v1723 = vld [vmem:[%s929 + $0x78] sm:$0xff]
        %v1724 = vld [vmem:[%s1073] sm:$0x3]
        %v1726 = vperm.slane %v1724, 0
        %v1727 = vperm.slane %v1724, 1
        %v1746 = vunpack.c.l.b16 %v1708
        %v1747 = vunpack.c.h.b16 %v1708
        %v1748 = vunpack.c.l.b16 %v1709
        %v1749 = vunpack.c.h.b16 %v1709
        %v1750 = vunpack.c.l.b16 %v1710
        %v1751 = vunpack.c.h.b16 %v1710
        %v1752 = vunpack.c.l.b16 %v1711
        %v1753 = vunpack.c.h.b16 %v1711
        %v1754 = vunpack.c.l.b16 %v1712
        %v1755 = vunpack.c.h.b16 %v1712
        %v1756 = vunpack.c.l.b16 %v1713
        %v1757 = vunpack.c.h.b16 %v1713
        %v1758 = vunpack.c.l.b16 %v1714
        %v1759 = vunpack.c.h.b16 %v1714
        %v1760 = vunpack.c.l.b16 %v1715
        %v1761 = vunpack.c.h.b16 %v1715
        %v1762 = vunpack.c.l.b16 %v1716
        %v1763 = vunpack.c.h.b16 %v1716
        %v1764 = vunpack.c.l.b16 %v1717
        %v1765 = vunpack.c.h.b16 %v1717
        %v1766 = vunpack.c.l.b16 %v1718
        %v1767 = vunpack.c.h.b16 %v1718
        %v1768 = vunpack.c.l.b16 %v1719
        %v1769 = vunpack.c.h.b16 %v1719
        %v1770 = vunpack.c.l.b16 %v1720
        %v1771 = vunpack.c.h.b16 %v1720
        %v1772 = vunpack.c.l.b16 %v1721
        %v1773 = vunpack.c.h.b16 %v1721
        %v1774 = vunpack.c.l.b16 %v1722
        %v1775 = vunpack.c.h.b16 %v1722
        %v1776 = vunpack.c.l.b16 %v1723
        %v1777 = vunpack.c.h.b16 %v1723
        %v1778 = vpack.c.b16 %v1748, %v1746
        %v1779 = vpack.c.b16 %v1749, %v1747
        %v1780 = vpack.c.b16 %v1752, %v1750
        %v1781 = vpack.c.b16 %v1753, %v1751
        %v1782 = vpack.c.b16 %v1756, %v1754
        %v1783 = vpack.c.b16 %v1757, %v1755
        %v1784 = vpack.c.b16 %v1760, %v1758
        %v1785 = vpack.c.b16 %v1761, %v1759
        %v1786 = vpack.c.b16 %v1764, %v1762
        %v1787 = vpack.c.b16 %v1765, %v1763
        %v1788 = vpack.c.b16 %v1768, %v1766
        %v1789 = vpack.c.b16 %v1769, %v1767
        %v1790 = vpack.c.b16 %v1772, %v1770
        %v1791 = vpack.c.b16 %v1773, %v1771
        %v1792 = vpack.c.b16 %v1776, %v1774
        %v1793 = vpack.c.b16 %v1777, %v1775
        %1810 = vmatpush.bf16.msra.mxu0 %v1792
        %1811 = vmatpush.bf16.msra.mxu0 %v1790
        %1812 = vmatpush.bf16.msra.mxu0 %v1788
        %1813 = vmatpush.bf16.msra.mxu0 %v1786
        %1814 = vmatpush.bf16.msra.mxu0 %v1784
        %1815 = vmatpush.bf16.msra.mxu0 %v1782
        %1816 = vmatpush.bf16.msra.mxu0 %v1780
        %1817 = vmatpush.bf16.msra.mxu0 %v1778
        %1818 = vmatmul.bf16.gmra.mxu0 %v1707
        %v1819 = vpop.f32.mrf.mxu0
        %v1820 = vadd.f32 %v1726, %v1819
        %v1821 = vpop.f32.mrf.mxu0
        %1822 = vdwg.mxu0
        %1823 = vmatpush.bf16.msra.mxu0 %v1793
        %1824 = vmatpush.bf16.msra.mxu0 %v1791
        %1825 = vmatpush.bf16.msra.mxu0 %v1789
        %1826 = vmatpush.bf16.msra.mxu0 %v1787
        %1827 = vmatpush.bf16.msra.mxu0 %v1785
        %1828 = vmatpush.bf16.msra.mxu0 %v1783
        %1829 = vmatpush.bf16.msra.mxu0 %v1781
        %1830 = vmatpush.bf16.msra.mxu0 %v1779
        %1831 = vmatmul.bf16.gmra.mxu0 %v1707
        %v1832 = vpop.f32.mrf.mxu0
        %v1833 = vadd.f32 %v1727, %v1832
        %v1834 = vpop.f32.mrf.mxu0
        %1835 = vdwg.mxu0
        %v1836 = vmul.f32 %v1820, 0.5
        %v1837 = vmul.f32 %v1833, 0.5
        %v1838 = vmul.f32 %v1820, 0.044715
        %v1839 = vmul.f32 %v1833, 0.044715
        %v1840 = vmul.f32 %v1838, %v1820
        %v1841 = vmul.f32 %v1839, %v1833
        %v1842 = vmul.f32 %v1840, %v1820
        %v1843 = vmul.f32 %v1841, %v1833
        %v1844 = vadd.f32 %v1820, %v1842
        %v1845 = vadd.f32 %v1833, %v1843
        %v1846 = vmul.f32 %v1844, 0.7978846
        %v1847 = vmul.f32 %v1845, 0.7978846
        %v1848 = vtanh.pop %v1846
        %v1849 = vtanh.pop %v1847
        %v1850 = vadd.f32 %v1848, 1.0
        %v1851 = vadd.f32 %v1849, 1.0
        %v1852 = vmul.f32 %v1836, %v1850
        %v1853 = vmul.f32 %v1837, %v1851
        %v1854 = vpack.c.bf16 %v1852, %v1852
        %v1855 = vpack.c.bf16 %v1853, %v1853
        %v1856 = vld [vmem:[%s939] sm:$0xf]
        %v1857 = vld [vmem:[%s939 + $0x4] sm:$0xf]
        %v1858 = vld [vmem:[%s939 + $0x8] sm:$0xf]
        %v1859 = vld [vmem:[%s939 + $0xc] sm:$0xf]
        %v1860 = vld [vmem:[%s939 + $0x10] sm:$0xf]
        %v1861 = vld [vmem:[%s939 + $0x14] sm:$0xf]
        %v1862 = vld [vmem:[%s939 + $0x18] sm:$0xf]
        %v1863 = vld [vmem:[%s939 + $0x1c] sm:$0xf]
        %v1864 = vld [vmem:[%s939 + $0x20] sm:$0xf]
        %v1865 = vld [vmem:[%s939 + $0x24] sm:$0xf]
        %v1866 = vld [vmem:[%s939 + $0x28] sm:$0xf]
        %v1867 = vld [vmem:[%s939 + $0x2c] sm:$0xf]
        %v1868 = vld [vmem:[%s939 + $0x30] sm:$0xf]
        %v1869 = vld [vmem:[%s939 + $0x34] sm:$0xf]
        %v1870 = vld [vmem:[%s939 + $0x38] sm:$0xf]
        %v1871 = vld [vmem:[%s939 + $0x3c] sm:$0xf]
        %v1872 = vld [vmem:[%s939 + $0x40] sm:$0xf]
        %v1873 = vld [vmem:[%s939 + $0x44] sm:$0xf]
        %v1874 = vld [vmem:[%s939 + $0x48] sm:$0xf]
        %v1875 = vld [vmem:[%s939 + $0x4c] sm:$0xf]
        %v1876 = vld [vmem:[%s939 + $0x50] sm:$0xf]
        %v1877 = vld [vmem:[%s939 + $0x54] sm:$0xf]
        %v1878 = vld [vmem:[%s939 + $0x58] sm:$0xf]
        %v1879 = vld [vmem:[%s939 + $0x5c] sm:$0xf]
        %v1880 = vld [vmem:[%s939 + $0x60] sm:$0xf]
        %v1881 = vld [vmem:[%s939 + $0x64] sm:$0xf]
        %v1882 = vld [vmem:[%s939 + $0x68] sm:$0xf]
        %v1883 = vld [vmem:[%s939 + $0x6c] sm:$0xf]
        %v1884 = vld [vmem:[%s939 + $0x70] sm:$0xf]
        %v1885 = vld [vmem:[%s939 + $0x74] sm:$0xf]
        %v1886 = vld [vmem:[%s939 + $0x78] sm:$0xf]
        %v1887 = vld [vmem:[%s939 + $0x7c] sm:$0xf]
        %v1888 = vld [vmem:[%s1076] sm:$0x1]
        %v1890 = vperm.slane %v1888, 0
        %v1924 = vunpack.c.l.b16 %v1856
        %v1925 = vunpack.c.l.b16 %v1857
        %v1926 = vunpack.c.l.b16 %v1858
        %v1927 = vunpack.c.l.b16 %v1859
        %v1928 = vunpack.c.l.b16 %v1860
        %v1929 = vunpack.c.l.b16 %v1861
        %v1930 = vunpack.c.l.b16 %v1862
        %v1931 = vunpack.c.l.b16 %v1863
        %v1932 = vunpack.c.l.b16 %v1864
        %v1933 = vunpack.c.l.b16 %v1865
        %v1934 = vunpack.c.l.b16 %v1866
        %v1935 = vunpack.c.l.b16 %v1867
        %v1936 = vunpack.c.l.b16 %v1868
        %v1937 = vunpack.c.l.b16 %v1869
        %v1938 = vunpack.c.l.b16 %v1870
        %v1939 = vunpack.c.l.b16 %v1871
        %v1940 = vunpack.c.l.b16 %v1872
        %v1941 = vunpack.c.l.b16 %v1873
        %v1942 = vunpack.c.l.b16 %v1874
        %v1943 = vunpack.c.l.b16 %v1875
        %v1944 = vunpack.c.l.b16 %v1876
        %v1945 = vunpack.c.l.b16 %v1877
        %v1946 = vunpack.c.l.b16 %v1878
        %v1947 = vunpack.c.l.b16 %v1879
        %v1948 = vunpack.c.l.b16 %v1880
        %v1949 = vunpack.c.l.b16 %v1881
        %v1950 = vunpack.c.l.b16 %v1882
        %v1951 = vunpack.c.l.b16 %v1883
        %v1952 = vunpack.c.l.b16 %v1884
        %v1953 = vunpack.c.l.b16 %v1885
        %v1954 = vunpack.c.l.b16 %v1886
        %v1955 = vunpack.c.l.b16 %v1887
        %v1956 = vpack.c.b16 %v1925, %v1924
        %v1957 = vpack.c.b16 %v1927, %v1926
        %v1958 = vpack.c.b16 %v1929, %v1928
        %v1959 = vpack.c.b16 %v1931, %v1930
        %v1960 = vpack.c.b16 %v1933, %v1932
        %v1961 = vpack.c.b16 %v1935, %v1934
        %v1962 = vpack.c.b16 %v1937, %v1936
        %v1963 = vpack.c.b16 %v1939, %v1938
        %v1964 = vpack.c.b16 %v1941, %v1940
        %v1965 = vpack.c.b16 %v1943, %v1942
        %v1966 = vpack.c.b16 %v1945, %v1944
        %v1967 = vpack.c.b16 %v1947, %v1946
        %v1968 = vpack.c.b16 %v1949, %v1948
        %v1969 = vpack.c.b16 %v1951, %v1950
        %v1970 = vpack.c.b16 %v1953, %v1952
        %v1971 = vpack.c.b16 %v1955, %v1954
        %1988 = vmatpush.bf16.msra.mxu0 %v1963
        %1989 = vmatpush.bf16.msra.mxu0 %v1962
        %1990 = vmatpush.bf16.msra.mxu0 %v1961
        %1991 = vmatpush.bf16.msra.mxu0 %v1960
        %1992 = vmatpush.bf16.msra.mxu0 %v1959
        %1993 = vmatpush.bf16.msra.mxu0 %v1958
        %1994 = vmatpush.bf16.msra.mxu0 %v1957
        %1995 = vmatpush.bf16.msra.mxu0 %v1956
        %1996 = vmatmul.bf16.gmra.mxu0 %v1854
        %v1997 = vpop.f32.mrf.mxu0
        %v1998 = vadd.f32 %v1890, %v1997
        %v1999 = vpop.f32.mrf.mxu0
        %2000 = vdwg.mxu0
        %2001 = vmatpush.bf16.msra.mxu0 %v1971
        %2002 = vmatpush.bf16.msra.mxu0 %v1970
        %2003 = vmatpush.bf16.msra.mxu0 %v1969
        %2004 = vmatpush.bf16.msra.mxu0 %v1968
        %2005 = vmatpush.bf16.msra.mxu0 %v1967
        %2006 = vmatpush.bf16.msra.mxu0 %v1966
        %2007 = vmatpush.bf16.msra.mxu0 %v1965
        %2008 = vmatpush.bf16.msra.mxu0 %v1964
        %2009 = vmatmul.bf16.gmra.mxu0 %v1855
        %v2010 = vpop.f32.mrf.mxu0
        %v2011 = vadd.f32 %v1998, %v2010
        %v2012 = vpop.f32.mrf.mxu0
        %2013 = vdwg.mxu0
        %v2014 = vadd.f32 %v2011, %v1706
        %2015 = vadd.xlane.f32.xlu0 %v2014
        %v2016 = vpop.xlane.xlu0 %2015
        %v2017 = vmul.f32 %v2016, %v1678
        %v2018 = vsub.f32 %v2014, %v2017
        %v2019 = vmul.f32 %v2018, %v2018
        %2020 = vadd.xlane.f32.xlu0 %v2019
        %v2021 = vpop.xlane.xlu0 %2020
        %v2022 = vmul.f32 %v2021, %v1678
        %v2023 = vadd.f32 %v2022, 1e-12
        %v2024 = vrsqrt.pop %v2023
        %v2025 = vmul.f32 %v2024, %v2023
        %v2026 = vmul.f32 %v2025, %v2024
        %v2027 = vmul.f32 0.5, %v2026
        %v2028 = vsub.f32 1.5, %v2027
        %v2029 = vmul.f32 %v2024, %v2028
        %vm2030 = vweird.f32 %v2023
        %vm2031 = vweird.f32 %v2024
        %vm2032 = vmor %vm2030, %vm2031
        %v2033 = vsel %vm2032, %v2024, %v2029
        %v2034 = vmul.f32 %v2018, %v2033
        %v2035 = vld [vmem:[%s1079] sm:$0x1]
        %v2037 = vperm.slane %v2035, 0
        %v2039 = vmul.f32 %v2034, %v2037
        %v2040 = vld [vmem:[%s1082] sm:$0x1]
        %v2042 = vperm.slane %v2040, 0
        %v2044 = vadd.f32 %v2039, %v2042
        %2045 = vst [vmem:[%s1060] sm:$0xff] %v2044
        %s2046 = sand.u32 %s538, 1
        %s2047 = scalar_lea.sflag [#allocation5], %s2046
        %s2048 = sand.u32 %s538, 1
        %s2049 = smul.addr %s2048, 8
        %s2050 = scalar_lea.vmem [#allocation21], %s2049
        // Predicated region
        $region141: #{tpu_custom_call.1} parent=91 // pred_check
          %p2051 = pneg %p548
        $region142: #{tpu_custom_call.1} parent=91 // pred_check_branch
          %2053 = sbr.rel (%p2051) target = $region144
        $region143: #{tpu_custom_call.1} parent=91 // pred_region
          %2055 = vsyncadd %s2047, 0
          %s2056 = smul.addr %s54, 8
          %s2057 = scalar_lea.hbm %s18, %s2056
          %s2059 = sshll.u32 %s2050, 4
          %s2060 = int_to_ptr.vmem [resolvable:$true] %s2059
          %s2061 = sshll.u32 %s2057, 4
          %s2062 = int_to_ptr.hbm [resolvable:$true] %s2061
          %2064 = dma.vmem_to_hbm [thread:$0]  %s2060, 128, %s2062, %s2047
        $region144: #{tpu_custom_call.1} parent=91 // pred_fallthru
          _
      $region92: #{tpu_custom_call.1} parent=5 // pred_fallthru
        _
      %p2065 = scmp.le.s32.totalorder 2, %s45
      // Predicated region
      $region145: #{tpu_custom_call.1} parent=5 // pred_check
        %p2066 = pneg %p2065
      $region146: #{tpu_custom_call.1} parent=5 // pred_check_branch
        %2068 = sbr.rel (%p2066) target = $region148
      $region147: #{tpu_custom_call.1} parent=5 // pred_region
        %s2069 = ssub.s32 %s45, 2
        // Predicated region
        $region149: #{tpu_custom_call.1} parent=147 // pred_check
          %p2070 = pneg %p554
        $region150: #{tpu_custom_call.1} parent=147 // pred_check_branch
          %2072 = sbr.rel (%p2070) target = $region152
        $region151: #{tpu_custom_call.1} parent=147 // pred_region
          %s2073 = sand.u32 %s539, 1
          %s2074 = scalar_lea.sflag [#allocation5], %s2073
          %s2075 = sand.u32 %s539, 1
          %s2076 = smul.addr %s2075, 8
          %s2077 = scalar_lea.vmem [#allocation21], %s2076
          %2079 = dma.done %s2074, 128
        $region152: #{tpu_custom_call.1} parent=147 // pred_fallthru
          _
      $region148: #{tpu_custom_call.1} parent=5 // pred_fallthru
        _
    $region6: #{tpu_custom_call.1} parent=1 // loop_footer
      %s49 = sadd.s32 1, %s45
    $region7: #{tpu_custom_call.1} parent=1 // loop_footer_branch
      %44 = sbr.rel target = $region3
    $region8: #{tpu_custom_call.1} parent=1 // loop_exit
      _
    %2080 = vsyncpa [#allocation4], 1
    %s2081 = scalar_lea.sflag [#allocation4], 1
    %2082 = vsyncpa %s2081, 1
    %2083 = vsyncpa [#allocation7], 1
    %s2084 = scalar_lea.sflag [#allocation7], 1
    %2085 = vsyncpa %s2084, 1
    %2086 = vsyncpa [#allocation10], 1
    %s2087 = scalar_lea.sflag [#allocation10], 1
    %2088 = vsyncpa %s2087, 1
    %2089 = vsyncpa [#allocation13], 1
    %s2090 = scalar_lea.sflag [#allocation13], 1
    %2091 = vsyncpa %s2090, 1
    %2092 = vsyncpa [#allocation16], 1
    %s2093 = scalar_lea.sflag [#allocation16], 1
    %2094 = vsyncpa %s2093, 1
    %2095 = vsyncpa [#allocation19], 1
    %s2096 = scalar_lea.sflag [#allocation19], 1
    %2097 = vsyncpa %s2096, 1
    %2098 = vsyncpa [#allocation5], 1
    %s2099 = scalar_lea.sflag [#allocation5], 1
    %2100 = vsyncpa %s2099, 1

</llo_original>
